<compile_context>
chip_gen: v6e
topology: v6e:2x2x1
jax: 0.10.0
libtpu: 0.0.40
codegen_flags: <defaults>
</compile_context>

<pallas_src>
import functools

import jax
import jax.numpy as jnp
from jax.experimental import pallas as pl
from jax.experimental.pallas import tpu as pltpu


def channel_net_kernel(x_ref, we_ref, be_ref, wd_ref, bd_ref, u01_ref,
                       code_ref, code_n_ref, out_ref, *, inv_bm, inv_snr):
    # ---- encoder linear: ch_code = x @ W_enc + b_enc  (bf16 MXU, f32 accumulate) ----
    ch_code = jnp.dot(x_ref[...], we_ref[...],
                      preferred_element_type=jnp.float32) + be_ref[...]
    code_ref[...] = ch_code

    # ---- AWGN channel (uniform noise, like torch.rand * n_power) ----
    # reciprocal-multiplies instead of divides (constants folded at trace time)
    x_power = jnp.sum(jnp.abs(ch_code)) * jnp.float32(inv_bm)
    n_power = x_power * jnp.float32(inv_snr)
    ch_code_n = ch_code + u01_ref[...] * n_power
    code_n_ref[...] = ch_code_n

    # ---- decoder linear: out = ch_code_with_n @ W_dec + b_dec  (bf16 MXU, f32 acc) ----
    out = jnp.dot(ch_code_n.astype(wd_ref.dtype), wd_ref[...],
                  preferred_element_type=jnp.float32) + bd_ref[...]
    out_ref[...] = out


def _pad_axis_to(a, axis, target):
    size = a.shape[axis]
    if size == target:
        return a
    widths = [(0, 0)] * a.ndim
    widths[axis] = (0, target - size)
    return jnp.pad(a, widths)


def channel_net_forward(x, w_enc, b_enc, w_dec, b_dec, noise_key, *, snr=25):
    batch, in_dims = x.shape
    mid_dims = w_enc.shape[1]

    # Uniform [0,1) noise generated in the wrapper (deterministic from noise_key).
    # TODO(synk): switch to pltpu.prng_seed/prng_random_bits once an in-kernel PRNG
    # is required (it has no interpret-mode lowering, so it is kept out of the kernel).
    u01 = jax.random.uniform(noise_key, (batch, mid_dims), dtype=jnp.float32)

    # bf16 for everything that feeds the MXU; biases stay f32.
    x_bf = x.astype(jnp.bfloat16)
    we_bf = w_enc.astype(jnp.bfloat16)
    wd_bf = w_dec.astype(jnp.bfloat16)

    # Lane-pad the in_dims (=800) axis to a multiple of 128 (zero padding is exact:
    # zero K-rows in W_enc and zero N-cols in W_dec/b_dec don't change the results).
    lane = 128
    in_padded = ((in_dims + lane - 1) // lane) * lane
    x_bf = _pad_axis_to(x_bf, 1, in_padded)
    we_bf = _pad_axis_to(we_bf, 0, in_padded)
    wd_bf = _pad_axis_to(wd_bf, 1, in_padded)
    bd_p = _pad_axis_to(b_dec, 1, in_padded)

    inv_bm = 1.0 / float(batch * mid_dims)
    inv_snr = float(10.0 ** (-snr / 10.0))

    kernel = functools.partial(channel_net_kernel, inv_bm=inv_bm, inv_snr=inv_snr)
    vmem = pl.BlockSpec(memory_space=pltpu.MemorySpace.VMEM)

    ch_code, ch_code_n, out_padded = pl.pallas_call(
        kernel,
        out_shape=(
            jax.ShapeDtypeStruct((batch, mid_dims), jnp.float32),   # ch_code
            jax.ShapeDtypeStruct((batch, mid_dims), jnp.float32),   # ch_code_with_n
            jax.ShapeDtypeStruct((batch, in_padded), jnp.float32),  # decoded x (padded)
        ),
        in_specs=[vmem, vmem, vmem, vmem, vmem, vmem],
        out_specs=(vmem, vmem, vmem),
    )(x_bf, we_bf, b_enc, wd_bf, bd_p, u01)

    return ch_code, ch_code_n, out_padded[:, :in_dims]


if __name__ == "__main__":
    # Module defaults: in_dims=800, mid_dims=128, snr=25.  Batch 128 (MXU-friendly M).
    batch, in_dims, mid_dims, snr = 128, 800, 128, 25

    key = jax.random.PRNGKey(0)
    kx, kwe, kbe, kwd, kbd, kn = jax.random.split(key, 6)

    x = jax.random.normal(kx, (batch, in_dims), dtype=jnp.float32)

    # Deterministic synthetic parameters (PyTorch weight [out,in] stored transposed).
    w_enc = jax.random.normal(kwe, (in_dims, mid_dims), dtype=jnp.float32) * 0.02
    b_enc = jax.random.normal(kbe, (1, mid_dims), dtype=jnp.float32) * 0.02
    w_dec = jax.random.normal(kwd, (mid_dims, in_dims), dtype=jnp.float32) * 0.02
    b_dec = jax.random.normal(kbd, (1, in_dims), dtype=jnp.float32) * 0.02

    ch_code, ch_code_n, x_out = channel_net_forward(
        x, w_enc, b_enc, w_dec, b_dec, kn, snr=snr)
    jax.block_until_ready((ch_code, ch_code_n, x_out))

    # ---- correctness checks against a bf16-matched plain-JAX reference ----
    x_bf = x.astype(jnp.bfloat16)
    ref_code = jnp.dot(x_bf, w_enc.astype(jnp.bfloat16),
                       preferred_element_type=jnp.float32) + b_enc
    assert jnp.allclose(ch_code, ref_code, atol=1e-2, rtol=1e-2)

    # noise = U[0,1) * n_power, with n_power derived from the kernel's ch_code
    x_power = jnp.sum(jnp.abs(ch_code)) / (batch * mid_dims)
    n_power = x_power / 10.0 ** (snr / 10.0)
    u01 = jax.random.uniform(kn, (batch, mid_dims), dtype=jnp.float32)
    noise = ch_code_n - ch_code
    assert jnp.allclose(noise, u01 * n_power, atol=1e-5, rtol=1e-4)
    assert bool(jnp.all(noise >= -1e-6)) and bool(jnp.all(noise <= n_power * 1.0001))

    ref_out = jnp.dot(ch_code_n.astype(jnp.bfloat16), w_dec.astype(jnp.bfloat16),
                      preferred_element_type=jnp.float32) + b_dec
    assert jnp.allclose(x_out, ref_out, atol=1e-2, rtol=1e-2)

    print("KERNEL_OK")
</pallas_src>

<mosaic_0001>
module attributes {stable_mosaic.version = 11 : i64} {
  func.func @channel_net_kernel(%arg0: memref<128x896xbf16, #tpu.memory_space<vmem>>, %arg1: memref<896x128xbf16, #tpu.memory_space<vmem>>, %arg2: memref<1x128xf32, #tpu.memory_space<vmem>>, %arg3: memref<128x896xbf16, #tpu.memory_space<vmem>>, %arg4: memref<1x896xf32, #tpu.memory_space<vmem>>, %arg5: memref<128x128xf32, #tpu.memory_space<vmem>>, %arg6: memref<128x128xf32, #tpu.memory_space<vmem>>, %arg7: memref<128x128xf32, #tpu.memory_space<vmem>>, %arg8: memref<128x896xf32, #tpu.memory_space<vmem>>) attributes {dimension_semantics = [], scalar_prefetch = 0 : i64, scratch_operands = 0 : i64, tpu.core_type = #tpu.core_type<tc>} {
    %c0 = arith.constant 0 : index
    %c0_0 = arith.constant 0 : index
    %0 = vector.load %arg0[%c0, %c0_0] : memref<128x896xbf16, #tpu.memory_space<vmem>>, vector<128x896xbf16>
    %c0_1 = arith.constant 0 : index
    %c0_2 = arith.constant 0 : index
    %1 = vector.load %arg1[%c0_1, %c0_2] : memref<896x128xbf16, #tpu.memory_space<vmem>>, vector<896x128xbf16>
    %cst = arith.constant dense<0.000000e+00> : vector<128x128xf32>
    %2 = tpu.matmul %0, %1, %cst {dimension_numbers = #tpu.dot_dimension_numbers<[1], [0], [0], [1], [0, 0, 1, 1], [], []>} : vector<128x896xbf16>, vector<896x128xbf16>, vector<128x128xf32> -> vector<128x128xf32>
    %c0_3 = arith.constant 0 : index
    %c0_4 = arith.constant 0 : index
    %3 = vector.load %arg2[%c0_3, %c0_4] : memref<1x128xf32, #tpu.memory_space<vmem>>, vector<1x128xf32>
    %4 = vector.broadcast %3 : vector<1x128xf32> to vector<128x128xf32>
    %5 = arith.addf %2, %4 : vector<128x128xf32>
    %c0_5 = arith.constant 0 : index
    %c0_6 = arith.constant 0 : index
    %6 = vector.load %arg6[%c0_5, %c0_6] : memref<128x128xf32, #tpu.memory_space<vmem>>, vector<128x128xf32>
    tpu.vector_store %arg6[%c0_5, %c0_6], %5 {strides = array<i32>} : memref<128x128xf32, #tpu.memory_space<vmem>>, vector<128x128xf32>,
    %7 = math.absf %5 : vector<128x128xf32>
    %8 = vector.shape_cast %7 : vector<128x128xf32> to vector<1x128x128xf32>
    %cst_7 = arith.constant dense<0.000000e+00> : vector<1xf32>
    %9 = vector.multi_reduction <add>, %8, %cst_7 [1, 2] : vector<1x128x128xf32> to vector<1xf32>
    %10 = vector.shape_cast %9 : vector<1xf32> to vector<1x1x1xf32>
    %11 = vector.extract %10[0, 0, 0] : f32 from vector<1x1x1xf32>
    %cst_8 = arith.constant 6.10351563E-5 : f32
    %12 = arith.mulf %11, %cst_8 : f32
    %cst_9 = arith.constant 0.00316227763 : f32
    %13 = arith.mulf %12, %cst_9 : f32
    %c0_10 = arith.constant 0 : index
    %c0_11 = arith.constant 0 : index
    %14 = vector.load %arg5[%c0_10, %c0_11] : memref<128x128xf32, #tpu.memory_space<vmem>>, vector<128x128xf32>
    %15 = vector.broadcast %13 : f32 to vector<128x128xf32>
    %16 = arith.mulf %14, %15 : vector<128x128xf32>
    %17 = arith.addf %5, %16 : vector<128x128xf32>
    %c0_12 = arith.constant 0 : index
    %c0_13 = arith.constant 0 : index
    %18 = vector.load %arg7[%c0_12, %c0_13] : memref<128x128xf32, #tpu.memory_space<vmem>>, vector<128x128xf32>
    tpu.vector_store %arg7[%c0_12, %c0_13], %17 {strides = array<i32>} : memref<128x128xf32, #tpu.memory_space<vmem>>, vector<128x128xf32>,
    %19 = arith.truncf %17 : vector<128x128xf32> to vector<128x128xbf16>
    %c0_14 = arith.constant 0 : index
    %c0_15 = arith.constant 0 : index
    %20 = vector.load %arg3[%c0_14, %c0_15] : memref<128x896xbf16, #tpu.memory_space<vmem>>, vector<128x896xbf16>
    %cst_16 = arith.constant dense<0.000000e+00> : vector<128x896xf32>
    %21 = tpu.matmul %19, %20, %cst_16 {dimension_numbers = #tpu.dot_dimension_numbers<[1], [0], [0], [1], [0, 0, 1, 1], [], []>} : vector<128x128xbf16>, vector<128x896xbf16>, vector<128x896xf32> -> vector<128x896xf32>
    %c0_17 = arith.constant 0 : index
    %c0_18 = arith.constant 0 : index
    %22 = vector.load %arg4[%c0_17, %c0_18] : memref<1x896xf32, #tpu.memory_space<vmem>>, vector<1x896xf32>
    %23 = vector.broadcast %22 : vector<1x896xf32> to vector<128x896xf32>
    %24 = arith.addf %21, %23 : vector<128x896xf32>
    %c0_19 = arith.constant 0 : index
    %c0_20 = arith.constant 0 : index
    %25 = vector.load %arg8[%c0_19, %c0_20] : memref<128x896xf32, #tpu.memory_space<vmem>>, vector<128x896xf32>
    tpu.vector_store %arg8[%c0_19, %c0_20], %24 {strides = array<i32>} : memref<128x896xf32, #tpu.memory_space<vmem>>, vector<128x896xf32>,
    return
  }
}

</mosaic_0001>

<llo_original>
// kernel: tpu_custom_call.1
$region0: #{tpu_custom_call.1}
  #allocation0 [shape = 'u32[]', space=smem, size = 0x4, offset = 0x4, fixed_abs, tag = 'smem constant byte address 0x4 - core index']
  #allocation1 [shape = 'u32[144,128]{1,0:T(1,128)}', space=vmem, size = 0x12000, scoped, tag = 'internal scratch']
  %s0 = inlined_call_operand.hbm [shape: bf16[128,896], index: 0, kind: input, shape index: {}]
  %s1 = inlined_call_operand.hbm [shape: bf16[896,128], index: 1, kind: input, shape index: {}]
  %s2 = inlined_call_operand.hbm [shape: f32[1,128], index: 2, kind: input, shape index: {}]
  %s3 = inlined_call_operand.hbm [shape: bf16[128,896], index: 3, kind: input, shape index: {}]
  %s4 = inlined_call_operand.vmem [shape: f32[1,896], index: 4, kind: input, shape index: {}]
  %s5 = inlined_call_operand.hbm [shape: f32[128,128], index: 5, kind: input, shape index: {}]
  %s6 = inlined_call_operand.hbm [shape: f32[128,128], index: 6, kind: output, shape index: {0}]
  %s7 = inlined_call_operand.hbm [shape: f32[128,128], index: 7, kind: output, shape index: {1}]
  %s8 = inlined_call_operand.hbm [shape: f32[128,896], index: 8, kind: output, shape index: {2}]
  %9 = xla_tuple %s6, %s7, %s8
  %s10 = sld [smem:[#allocation0]]
  $region70: #{tpu_custom_call.1} parent=0
    _
  %s12 = ssub.s32 1, %s10
  %s13 = scalar_select 0, %s12, %s10
  $region1: #{tpu_custom_call.1} parent=0
    #allocation2 [shape = 'u8[229376]{0}', space=vmem, size = 0x38000, scoped, tag = 'input window, operand 0, single buffered']
    #allocation3 [shape = 's32[1]{0}', space=sflag, size = 0x4, scoped, tag = 'scoped memory for tpu_custom_call.1']
    #allocation4 [shape = 's32[1]{0}', space=sflag, size = 0x4, scoped, tag = 'scoped memory for tpu_custom_call.1']
    #allocation5 [shape = 'u8[229376]{0}', space=vmem, size = 0x38000, scoped, tag = 'input window, operand 1, single buffered']
    #allocation6 [shape = 's32[1]{0}', space=sflag, size = 0x4, scoped, tag = 'scoped memory for tpu_custom_call.1']
    #allocation7 [shape = 'u8[512]{0}', space=vmem, size = 0x400, scoped, tag = 'input window, operand 2, single buffered']
    #allocation8 [shape = 'u8[229376]{0}', space=vmem, size = 0x38000, scoped, tag = 'input window, operand 3, single buffered']
    #allocation9 [shape = 's32[1]{0}', space=sflag, size = 0x4, scoped, tag = 'scoped memory for tpu_custom_call.1']
    #allocation10 [shape = 'u8[65536]{0}', space=vmem, size = 0x10000, scoped, tag = 'input window, operand 5, single buffered']
    #allocation11 [shape = 'u8[65536]{0}', space=vmem, size = 0x10000, scoped, tag = 'output window, operand 0, single buffered']
    #allocation12 [shape = 'u8[65536]{0}', space=vmem, size = 0x10000, scoped, tag = 'output window, operand 1, single buffered']
    #allocation13 [shape = 's32[1]{0}', space=sflag, size = 0x4, scoped, tag = 'scoped memory for tpu_custom_call.1']
    #allocation14 [shape = 'u8[458752]{0}', space=vmem, size = 0x70000, scoped, tag = 'output window, operand 2, single buffered']
    %14 = vsyncpa [#allocation3], 0
    %15 = vsyncpa [#allocation6], 0
    %16 = vsyncpa [#allocation9], 0
    %17 = vsyncpa [#allocation4], 0
    %18 = vsyncpa [#allocation13], 0
    // Predicated region
    $region2: #{tpu_custom_call.1} parent=1 // pred_check
      _
    $region3: #{tpu_custom_call.1} parent=1 // pred_check_branch
      %20 = sbr.rel (0) target = $region5
    $region4: #{tpu_custom_call.1} parent=1 // pred_region
      %s22 = ssub.s32 7168, 7168
      %23 = vsyncadd [#allocation3], %s22
      %s24 = sshll.u32 [#allocation2], 4
      %s25 = int_to_ptr.vmem [resolvable:$true] %s24
      %30 = dma.hbm_to_vmem [thread:$0]  %s0, 7168, %s25, [#allocation3], 448, 448, 28
    $region5: #{tpu_custom_call.1} parent=1 // pred_fallthru
      _
    // Predicated region
    $region6: #{tpu_custom_call.1} parent=1 // pred_check
      _
    $region7: #{tpu_custom_call.1} parent=1 // pred_check_branch
      %32 = sbr.rel (0) target = $region9
    $region8: #{tpu_custom_call.1} parent=1 // pred_region
      %s34 = ssub.s32 7168, 7168
      %35 = vsyncadd [#allocation6], %s34
      %s36 = sshll.u32 [#allocation5], 4
      %s37 = int_to_ptr.vmem [resolvable:$true] %s36
      %42 = dma.hbm_to_vmem [thread:$0]  %s1, 7168, %s37, [#allocation6], 64, 64, 4
    $region9: #{tpu_custom_call.1} parent=1 // pred_fallthru
      _
    // Predicated region
    $region10: #{tpu_custom_call.1} parent=1 // pred_check
      _
    $region11: #{tpu_custom_call.1} parent=1 // pred_check_branch
      %44 = sbr.rel (0) target = $region13
    $region12: #{tpu_custom_call.1} parent=1 // pred_region
      %s46 = ssub.s32 16, 16
      %47 = vsyncadd [#allocation6], %s46
      %s49 = sshll.u32 [#allocation7], 4
      %s50 = int_to_ptr.vmem [resolvable:$true] %s49
      %52 = dma.hbm_to_vmem [thread:$0]  %s2, 16, %s50, [#allocation6]
    $region13: #{tpu_custom_call.1} parent=1 // pred_fallthru
      _
    // Predicated region
    $region14: #{tpu_custom_call.1} parent=1 // pred_check
      _
    $region15: #{tpu_custom_call.1} parent=1 // pred_check_branch
      %54 = sbr.rel (0) target = $region17
    $region16: #{tpu_custom_call.1} parent=1 // pred_region
      %s56 = ssub.s32 7168, 7168
      %57 = vsyncadd [#allocation9], %s56
      %s58 = sshll.u32 [#allocation8], 4
      %s59 = int_to_ptr.vmem [resolvable:$true] %s58
      %64 = dma.hbm_to_vmem [thread:$0]  %s3, 7168, %s59, [#allocation9], 448, 448, 28
    $region17: #{tpu_custom_call.1} parent=1 // pred_fallthru
      _
    // Predicated region
    $region18: #{tpu_custom_call.1} parent=1 // pred_check
      _
    $region19: #{tpu_custom_call.1} parent=1 // pred_check_branch
      %66 = sbr.rel (0) target = $region21
    $region20: #{tpu_custom_call.1} parent=1 // pred_region
      _
    $region21: #{tpu_custom_call.1} parent=1 // pred_fallthru
      _
    // Predicated region
    $region22: #{tpu_custom_call.1} parent=1 // pred_check
      _
    $region23: #{tpu_custom_call.1} parent=1 // pred_check_branch
      %68 = sbr.rel (0) target = $region25
    $region24: #{tpu_custom_call.1} parent=1 // pred_region
      %s70 = ssub.s32 2048, 2048
      %71 = vsyncadd [#allocation9], %s70
      %s72 = sshll.u32 [#allocation10], 4
      %s73 = int_to_ptr.vmem [resolvable:$true] %s72
      %78 = dma.hbm_to_vmem [thread:$0]  %s5, 2048, %s73, [#allocation9], 128, 128, 8
    $region25: #{tpu_custom_call.1} parent=1 // pred_fallthru
      _
    // Predicated region
    $region26: #{tpu_custom_call.1} parent=1 // pred_check
      _
    $region27: #{tpu_custom_call.1} parent=1 // pred_check_branch
      %80 = sbr.rel (0) target = $region29
    $region28: #{tpu_custom_call.1} parent=1 // pred_region
      %81 = dma.done [#allocation3], 7168
    $region29: #{tpu_custom_call.1} parent=1 // pred_fallthru
      _
    // Predicated region
    $region30: #{tpu_custom_call.1} parent=1 // pred_check
      _
    $region31: #{tpu_custom_call.1} parent=1 // pred_check_branch
      %83 = sbr.rel (0) target = $region33
    $region32: #{tpu_custom_call.1} parent=1 // pred_region
      %84 = dma.done [#allocation6], 7168
    $region33: #{tpu_custom_call.1} parent=1 // pred_fallthru
      _
    // Predicated region
    $region34: #{tpu_custom_call.1} parent=1 // pred_check
      _
    $region35: #{tpu_custom_call.1} parent=1 // pred_check_branch
      %86 = sbr.rel (0) target = $region37
    $region36: #{tpu_custom_call.1} parent=1 // pred_region
      %87 = dma.done [#allocation6], 16
    $region37: #{tpu_custom_call.1} parent=1 // pred_fallthru
      _
    // Predicated region
    $region38: #{tpu_custom_call.1} parent=1 // pred_check
      _
    $region39: #{tpu_custom_call.1} parent=1 // pred_check_branch
      %89 = sbr.rel (0) target = $region41
    $region40: #{tpu_custom_call.1} parent=1 // pred_region
      %90 = dma.done [#allocation9], 7168
    $region41: #{tpu_custom_call.1} parent=1 // pred_fallthru
      _
    // Predicated region
    $region42: #{tpu_custom_call.1} parent=1 // pred_check
      _
    $region43: #{tpu_custom_call.1} parent=1 // pred_check_branch
      %92 = sbr.rel (0) target = $region45
    $region44: #{tpu_custom_call.1} parent=1 // pred_region
      %93 = dma.done [#allocation9], 2048
    $region45: #{tpu_custom_call.1} parent=1 // pred_fallthru
      _
    %v95 = vld [vmem:[#allocation2] sm:$0xff]
    %v96 = vld [vmem:[#allocation2 + $0x8] sm:$0xff]
    %v97 = vld [vmem:[#allocation2 + $0x10] sm:$0xff]
    %v98 = vld [vmem:[#allocation2 + $0x18] sm:$0xf]
    %v99 = vld [vmem:[#allocation2 + $0x1c] sm:$0xff]
    %v100 = vld [vmem:[#allocation2 + $0x24] sm:$0xff]
    %v101 = vld [vmem:[#allocation2 + $0x2c] sm:$0xff]
    %v102 = vld [vmem:[#allocation2 + $0x34] sm:$0xf]
    %v103 = vld [vmem:[#allocation2 + $0x38] sm:$0xff]
    %v104 = vld [vmem:[#allocation2 + $0x40] sm:$0xff]
    %v105 = vld [vmem:[#allocation2 + $0x48] sm:$0xff]
    %v106 = vld [vmem:[#allocation2 + $0x50] sm:$0xf]
    %v107 = vld [vmem:[#allocation2 + $0x54] sm:$0xff]
    %v108 = vld [vmem:[#allocation2 + $0x5c] sm:$0xff]
    %v109 = vld [vmem:[#allocation2 + $0x64] sm:$0xff]
    %v110 = vld [vmem:[#allocation2 + $0x6c] sm:$0xf]
    %v111 = vld [vmem:[#allocation2 + $0x70] sm:$0xff]
    %v112 = vld [vmem:[#allocation2 + $0x78] sm:$0xff]
    %v113 = vld [vmem:[#allocation2 + $0x80] sm:$0xff]
    %v114 = vld [vmem:[#allocation2 + $0x88] sm:$0xf]
    %v115 = vld [vmem:[#allocation2 + $0x8c] sm:$0xff]
    %v116 = vld [vmem:[#allocation2 + $0x94] sm:$0xff]
    %v117 = vld [vmem:[#allocation2 + $0x9c] sm:$0xff]
    %v118 = vld [vmem:[#allocation2 + $0xa4] sm:$0xf]
    %v119 = vld [vmem:[#allocation2 + $0xa8] sm:$0xff]
    %v120 = vld [vmem:[#allocation2 + $0xb0] sm:$0xff]
    %v121 = vld [vmem:[#allocation2 + $0xb8] sm:$0xff]
    %v122 = vld [vmem:[#allocation2 + $0xc0] sm:$0xf]
    %v123 = vld [vmem:[#allocation2 + $0xc4] sm:$0xff]
    %v124 = vld [vmem:[#allocation2 + $0xcc] sm:$0xff]
    %v125 = vld [vmem:[#allocation2 + $0xd4] sm:$0xff]
    %v126 = vld [vmem:[#allocation2 + $0xdc] sm:$0xf]
    %v127 = vld [vmem:[#allocation2 + $0xe0] sm:$0xff]
    %v128 = vld [vmem:[#allocation2 + $0xe8] sm:$0xff]
    %v129 = vld [vmem:[#allocation2 + $0xf0] sm:$0xff]
    %v130 = vld [vmem:[#allocation2 + $0xf8] sm:$0xf]
    %v131 = vld [vmem:[#allocation2 + $0xfc] sm:$0xff]
    %v132 = vld [vmem:[#allocation2 + $0x104] sm:$0xff]
    %v133 = vld [vmem:[#allocation2 + $0x10c] sm:$0xff]
    %v134 = vld [vmem:[#allocation2 + $0x114] sm:$0xf]
    %v135 = vld [vmem:[#allocation2 + $0x118] sm:$0xff]
    %v136 = vld [vmem:[#allocation2 + $0x120] sm:$0xff]
    %v137 = vld [vmem:[#allocation2 + $0x128] sm:$0xff]
    %v138 = vld [vmem:[#allocation2 + $0x130] sm:$0xf]
    %v139 = vld [vmem:[#allocation2 + $0x134] sm:$0xff]
    %v140 = vld [vmem:[#allocation2 + $0x13c] sm:$0xff]
    %v141 = vld [vmem:[#allocation2 + $0x144] sm:$0xff]
    %v142 = vld [vmem:[#allocation2 + $0x14c] sm:$0xf]
    %v143 = vld [vmem:[#allocation2 + $0x150] sm:$0xff]
    %v144 = vld [vmem:[#allocation2 + $0x158] sm:$0xff]
    %v145 = vld [vmem:[#allocation2 + $0x160] sm:$0xff]
    %v146 = vld [vmem:[#allocation2 + $0x168] sm:$0xf]
    %v147 = vld [vmem:[#allocation2 + $0x16c] sm:$0xff]
    %v148 = vld [vmem:[#allocation2 + $0x174] sm:$0xff]
    %v149 = vld [vmem:[#allocation2 + $0x17c] sm:$0xff]
    %v150 = vld [vmem:[#allocation2 + $0x184] sm:$0xf]
    %v151 = vld [vmem:[#allocation2 + $0x188] sm:$0xff]
    %v152 = vld [vmem:[#allocation2 + $0x190] sm:$0xff]
    %v153 = vld [vmem:[#allocation2 + $0x198] sm:$0xff]
    %v154 = vld [vmem:[#allocation2 + $0x1a0] sm:$0xf]
    %v155 = vld [vmem:[#allocation2 + $0x1a4] sm:$0xff]
    %v156 = vld [vmem:[#allocation2 + $0x1ac] sm:$0xff]
    %v157 = vld [vmem:[#allocation2 + $0x1b4] sm:$0xff]
    %v158 = vld [vmem:[#allocation2 + $0x1bc] sm:$0xf]
    %v159 = vld [vmem:[#allocation5] sm:$0xf]
    %v160 = vld [vmem:[#allocation5 + $0x4] sm:$0xf]
    %v161 = vld [vmem:[#allocation5 + $0x8] sm:$0xf]
    %v162 = vld [vmem:[#allocation5 + $0xc] sm:$0xf]
    %v163 = vld [vmem:[#allocation5 + $0x10] sm:$0xf]
    %v164 = vld [vmem:[#allocation5 + $0x14] sm:$0xf]
    %v165 = vld [vmem:[#allocation5 + $0x18] sm:$0xf]
    %v166 = vld [vmem:[#allocation5 + $0x1c] sm:$0xf]
    %v167 = vld [vmem:[#allocation5 + $0x20] sm:$0xf]
    %v168 = vld [vmem:[#allocation5 + $0x24] sm:$0xf]
    %v169 = vld [vmem:[#allocation5 + $0x28] sm:$0xf]
    %v170 = vld [vmem:[#allocation5 + $0x2c] sm:$0xf]
    %v171 = vld [vmem:[#allocation5 + $0x30] sm:$0xf]
    %v172 = vld [vmem:[#allocation5 + $0x34] sm:$0xf]
    %v173 = vld [vmem:[#allocation5 + $0x38] sm:$0xf]
    %v174 = vld [vmem:[#allocation5 + $0x3c] sm:$0xf]
    %v175 = vld [vmem:[#allocation5 + $0x40] sm:$0xf]
    %v176 = vld [vmem:[#allocation5 + $0x44] sm:$0xf]
    %v177 = vld [vmem:[#allocation5 + $0x48] sm:$0xf]
    %v178 = vld [vmem:[#allocation5 + $0x4c] sm:$0xf]
    %v179 = vld [vmem:[#allocation5 + $0x50] sm:$0xf]
    %v180 = vld [vmem:[#allocation5 + $0x54] sm:$0xf]
    %v181 = vld [vmem:[#allocation5 + $0x58] sm:$0xf]
    %v182 = vld [vmem:[#allocation5 + $0x5c] sm:$0xf]
    %v183 = vld [vmem:[#allocation5 + $0x60] sm:$0xf]
    %v184 = vld [vmem:[#allocation5 + $0x64] sm:$0xf]
    %v185 = vld [vmem:[#allocation5 + $0x68] sm:$0xf]
    %v186 = vld [vmem:[#allocation5 + $0x6c] sm:$0xf]
    %v187 = vld [vmem:[#allocation5 + $0x70] sm:$0xf]
    %v188 = vld [vmem:[#allocation5 + $0x74] sm:$0xf]
    %v189 = vld [vmem:[#allocation5 + $0x78] sm:$0xf]
    %v190 = vld [vmem:[#allocation5 + $0x7c] sm:$0xf]
    %v191 = vld [vmem:[#allocation5 + $0x80] sm:$0xf]
    %v192 = vld [vmem:[#allocation5 + $0x84] sm:$0xf]
    %v193 = vld [vmem:[#allocation5 + $0x88] sm:$0xf]
    %v194 = vld [vmem:[#allocation5 + $0x8c] sm:$0xf]
    %v195 = vld [vmem:[#allocation5 + $0x90] sm:$0xf]
    %v196 = vld [vmem:[#allocation5 + $0x94] sm:$0xf]
    %v197 = vld [vmem:[#allocation5 + $0x98] sm:$0xf]
    %v198 = vld [vmem:[#allocation5 + $0x9c] sm:$0xf]
    %v199 = vld [vmem:[#allocation5 + $0xa0] sm:$0xf]
    %v200 = vld [vmem:[#allocation5 + $0xa4] sm:$0xf]
    %v201 = vld [vmem:[#allocation5 + $0xa8] sm:$0xf]
    %v202 = vld [vmem:[#allocation5 + $0xac] sm:$0xf]
    %v203 = vld [vmem:[#allocation5 + $0xb0] sm:$0xf]
    %v204 = vld [vmem:[#allocation5 + $0xb4] sm:$0xf]
    %v205 = vld [vmem:[#allocation5 + $0xb8] sm:$0xf]
    %v206 = vld [vmem:[#allocation5 + $0xbc] sm:$0xf]
    %v207 = vld [vmem:[#allocation5 + $0xc0] sm:$0xf]
    %v208 = vld [vmem:[#allocation5 + $0xc4] sm:$0xf]
    %v209 = vld [vmem:[#allocation5 + $0xc8] sm:$0xf]
    %v210 = vld [vmem:[#allocation5 + $0xcc] sm:$0xf]
    %v211 = vld [vmem:[#allocation5 + $0xd0] sm:$0xf]
    %v212 = vld [vmem:[#allocation5 + $0xd4] sm:$0xf]
    %v213 = vld [vmem:[#allocation5 + $0xd8] sm:$0xf]
    %v214 = vld [vmem:[#allocation5 + $0xdc] sm:$0xf]
    %v215 = vld [vmem:[#allocation5 + $0xe0] sm:$0xf]
    %v216 = vld [vmem:[#allocation5 + $0xe4] sm:$0xf]
    %v217 = vld [vmem:[#allocation5 + $0xe8] sm:$0xf]
    %v218 = vld [vmem:[#allocation5 + $0xec] sm:$0xf]
    %v219 = vld [vmem:[#allocation5 + $0xf0] sm:$0xf]
    %v220 = vld [vmem:[#allocation5 + $0xf4] sm:$0xf]
    %v221 = vld [vmem:[#allocation5 + $0xf8] sm:$0xf]
    %v222 = vld [vmem:[#allocation5 + $0xfc] sm:$0xf]
    %v223 = vld [vmem:[#allocation5 + $0x100] sm:$0xf]
    %v224 = vld [vmem:[#allocation5 + $0x104] sm:$0xf]
    %v225 = vld [vmem:[#allocation5 + $0x108] sm:$0xf]
    %v226 = vld [vmem:[#allocation5 + $0x10c] sm:$0xf]
    %v227 = vld [vmem:[#allocation5 + $0x110] sm:$0xf]
    %v228 = vld [vmem:[#allocation5 + $0x114] sm:$0xf]
    %v229 = vld [vmem:[#allocation5 + $0x118] sm:$0xf]
    %v230 = vld [vmem:[#allocation5 + $0x11c] sm:$0xf]
    %v231 = vld [vmem:[#allocation5 + $0x120] sm:$0xf]
    %v232 = vld [vmem:[#allocation5 + $0x124] sm:$0xf]
    %v233 = vld [vmem:[#allocation5 + $0x128] sm:$0xf]
    %v234 = vld [vmem:[#allocation5 + $0x12c] sm:$0xf]
    %v235 = vld [vmem:[#allocation5 + $0x130] sm:$0xf]
    %v236 = vld [vmem:[#allocation5 + $0x134] sm:$0xf]
    %v237 = vld [vmem:[#allocation5 + $0x138] sm:$0xf]
    %v238 = vld [vmem:[#allocation5 + $0x13c] sm:$0xf]
    %v239 = vld [vmem:[#allocation5 + $0x140] sm:$0xf]
    %v240 = vld [vmem:[#allocation5 + $0x144] sm:$0xf]
    %v241 = vld [vmem:[#allocation5 + $0x148] sm:$0xf]
    %v242 = vld [vmem:[#allocation5 + $0x14c] sm:$0xf]
    %v243 = vld [vmem:[#allocation5 + $0x150] sm:$0xf]
    %v244 = vld [vmem:[#allocation5 + $0x154] sm:$0xf]
    %v245 = vld [vmem:[#allocation5 + $0x158] sm:$0xf]
    %v246 = vld [vmem:[#allocation5 + $0x15c] sm:$0xf]
    %v247 = vld [vmem:[#allocation5 + $0x160] sm:$0xf]
    %v248 = vld [vmem:[#allocation5 + $0x164] sm:$0xf]
    %v249 = vld [vmem:[#allocation5 + $0x168] sm:$0xf]
    %v250 = vld [vmem:[#allocation5 + $0x16c] sm:$0xf]
    %v251 = vld [vmem:[#allocation5 + $0x170] sm:$0xf]
    %v252 = vld [vmem:[#allocation5 + $0x174] sm:$0xf]
    %v253 = vld [vmem:[#allocation5 + $0x178] sm:$0xf]
    %v254 = vld [vmem:[#allocation5 + $0x17c] sm:$0xf]
    %v255 = vld [vmem:[#allocation5 + $0x180] sm:$0xf]
    %v256 = vld [vmem:[#allocation5 + $0x184] sm:$0xf]
    %v257 = vld [vmem:[#allocation5 + $0x188] sm:$0xf]
    %v258 = vld [vmem:[#allocation5 + $0x18c] sm:$0xf]
    %v259 = vld [vmem:[#allocation5 + $0x190] sm:$0xf]
    %v260 = vld [vmem:[#allocation5 + $0x194] sm:$0xf]
    %v261 = vld [vmem:[#allocation5 + $0x198] sm:$0xf]
    %v262 = vld [vmem:[#allocation5 + $0x19c] sm:$0xf]
    %v263 = vld [vmem:[#allocation5 + $0x1a0] sm:$0xf]
    %v264 = vld [vmem:[#allocation5 + $0x1a4] sm:$0xf]
    %v265 = vld [vmem:[#allocation5 + $0x1a8] sm:$0xf]
    %v266 = vld [vmem:[#allocation5 + $0x1ac] sm:$0xf]
    %v267 = vld [vmem:[#allocation5 + $0x1b0] sm:$0xf]
    %v268 = vld [vmem:[#allocation5 + $0x1b4] sm:$0xf]
    %v269 = vld [vmem:[#allocation5 + $0x1b8] sm:$0xf]
    %v270 = vld [vmem:[#allocation5 + $0x1bc] sm:$0xf]
    %v271 = vld [vmem:[#allocation7] sm:$0x1]
    %v273 = vlaneseq
    %v274 = vshrl.u32 %v273, 7
    %v275 = vsub.s32 0, %v274
    %v276 = vrot.slane %v271, %v275
    %v342 = vunpack.c.l.b16 %v95
    %v343 = vunpack.c.h.b16 %v95
    %v344 = vunpack.c.l.b16 %v96
    %v345 = vunpack.c.h.b16 %v96
    %v346 = vunpack.c.l.b16 %v97
    %v347 = vunpack.c.h.b16 %v97
    %v348 = vunpack.c.l.b16 %v98
    %v349 = vunpack.c.l.b16 %v99
    %v350 = vunpack.c.h.b16 %v99
    %v351 = vunpack.c.l.b16 %v100
    %v352 = vunpack.c.h.b16 %v100
    %v353 = vunpack.c.l.b16 %v101
    %v354 = vunpack.c.h.b16 %v101
    %v355 = vunpack.c.l.b16 %v102
    %v356 = vunpack.c.l.b16 %v103
    %v357 = vunpack.c.h.b16 %v103
    %v358 = vunpack.c.l.b16 %v104
    %v359 = vunpack.c.h.b16 %v104
    %v360 = vunpack.c.l.b16 %v105
    %v361 = vunpack.c.h.b16 %v105
    %v362 = vunpack.c.l.b16 %v106
    %v363 = vunpack.c.l.b16 %v107
    %v364 = vunpack.c.h.b16 %v107
    %v365 = vunpack.c.l.b16 %v108
    %v366 = vunpack.c.h.b16 %v108
    %v367 = vunpack.c.l.b16 %v109
    %v368 = vunpack.c.h.b16 %v109
    %v369 = vunpack.c.l.b16 %v110
    %v370 = vunpack.c.l.b16 %v111
    %v371 = vunpack.c.h.b16 %v111
    %v372 = vunpack.c.l.b16 %v112
    %v373 = vunpack.c.h.b16 %v112
    %v374 = vunpack.c.l.b16 %v113
    %v375 = vunpack.c.h.b16 %v113
    %v376 = vunpack.c.l.b16 %v114
    %v377 = vunpack.c.l.b16 %v115
    %v378 = vunpack.c.h.b16 %v115
    %v379 = vunpack.c.l.b16 %v116
    %v380 = vunpack.c.h.b16 %v116
    %v381 = vunpack.c.l.b16 %v117
    %v382 = vunpack.c.h.b16 %v117
    %v383 = vunpack.c.l.b16 %v118
    %v384 = vunpack.c.l.b16 %v119
    %v385 = vunpack.c.h.b16 %v119
    %v386 = vunpack.c.l.b16 %v120
    %v387 = vunpack.c.h.b16 %v120
    %v388 = vunpack.c.l.b16 %v121
    %v389 = vunpack.c.h.b16 %v121
    %v390 = vunpack.c.l.b16 %v122
    %v391 = vunpack.c.l.b16 %v123
    %v392 = vunpack.c.h.b16 %v123
    %v393 = vunpack.c.l.b16 %v124
    %v394 = vunpack.c.h.b16 %v124
    %v395 = vunpack.c.l.b16 %v125
    %v396 = vunpack.c.h.b16 %v125
    %v397 = vunpack.c.l.b16 %v126
    %v398 = vunpack.c.l.b16 %v127
    %v399 = vunpack.c.h.b16 %v127
    %v400 = vunpack.c.l.b16 %v128
    %v401 = vunpack.c.h.b16 %v128
    %v402 = vunpack.c.l.b16 %v129
    %v403 = vunpack.c.h.b16 %v129
    %v404 = vunpack.c.l.b16 %v130
    %v405 = vunpack.c.l.b16 %v131
    %v406 = vunpack.c.h.b16 %v131
    %v407 = vunpack.c.l.b16 %v132
    %v408 = vunpack.c.h.b16 %v132
    %v409 = vunpack.c.l.b16 %v133
    %v410 = vunpack.c.h.b16 %v133
    %v411 = vunpack.c.l.b16 %v134
    %v412 = vunpack.c.l.b16 %v135
    %v413 = vunpack.c.h.b16 %v135
    %v414 = vunpack.c.l.b16 %v136
    %v415 = vunpack.c.h.b16 %v136
    %v416 = vunpack.c.l.b16 %v137
    %v417 = vunpack.c.h.b16 %v137
    %v418 = vunpack.c.l.b16 %v138
    %v419 = vunpack.c.l.b16 %v139
    %v420 = vunpack.c.h.b16 %v139
    %v421 = vunpack.c.l.b16 %v140
    %v422 = vunpack.c.h.b16 %v140
    %v423 = vunpack.c.l.b16 %v141
    %v424 = vunpack.c.h.b16 %v141
    %v425 = vunpack.c.l.b16 %v142
    %v426 = vunpack.c.l.b16 %v143
    %v427 = vunpack.c.h.b16 %v143
    %v428 = vunpack.c.l.b16 %v144
    %v429 = vunpack.c.h.b16 %v144
    %v430 = vunpack.c.l.b16 %v145
    %v431 = vunpack.c.h.b16 %v145
    %v432 = vunpack.c.l.b16 %v146
    %v433 = vunpack.c.l.b16 %v147
    %v434 = vunpack.c.h.b16 %v147
    %v435 = vunpack.c.l.b16 %v148
    %v436 = vunpack.c.h.b16 %v148
    %v437 = vunpack.c.l.b16 %v149
    %v438 = vunpack.c.h.b16 %v149
    %v439 = vunpack.c.l.b16 %v150
    %v440 = vunpack.c.l.b16 %v151
    %v441 = vunpack.c.h.b16 %v151
    %v442 = vunpack.c.l.b16 %v152
    %v443 = vunpack.c.h.b16 %v152
    %v444 = vunpack.c.l.b16 %v153
    %v445 = vunpack.c.h.b16 %v153
    %v446 = vunpack.c.l.b16 %v154
    %v447 = vunpack.c.l.b16 %v155
    %v448 = vunpack.c.h.b16 %v155
    %v449 = vunpack.c.l.b16 %v156
    %v450 = vunpack.c.h.b16 %v156
    %v451 = vunpack.c.l.b16 %v157
    %v452 = vunpack.c.h.b16 %v157
    %v453 = vunpack.c.l.b16 %v158
    %v454 = vpack.c.b16 %v349, %v342
    %v455 = vpack.c.b16 %v350, %v343
    %v456 = vpack.c.b16 %v351, %v344
    %v457 = vpack.c.b16 %v352, %v345
    %v458 = vpack.c.b16 %v353, %v346
    %v459 = vpack.c.b16 %v354, %v347
    %v460 = vpack.c.b16 %v355, %v348
    %v461 = vpack.c.b16 %v363, %v356
    %v462 = vpack.c.b16 %v364, %v357
    %v463 = vpack.c.b16 %v365, %v358
    %v464 = vpack.c.b16 %v366, %v359
    %v465 = vpack.c.b16 %v367, %v360
    %v466 = vpack.c.b16 %v368, %v361
    %v467 = vpack.c.b16 %v369, %v362
    %v468 = vpack.c.b16 %v377, %v370
    %v469 = vpack.c.b16 %v378, %v371
    %v470 = vpack.c.b16 %v379, %v372
    %v471 = vpack.c.b16 %v380, %v373
    %v472 = vpack.c.b16 %v381, %v374
    %v473 = vpack.c.b16 %v382, %v375
    %v474 = vpack.c.b16 %v383, %v376
    %v475 = vpack.c.b16 %v391, %v384
    %v476 = vpack.c.b16 %v392, %v385
    %v477 = vpack.c.b16 %v393, %v386
    %v478 = vpack.c.b16 %v394, %v387
    %v479 = vpack.c.b16 %v395, %v388
    %v480 = vpack.c.b16 %v396, %v389
    %v481 = vpack.c.b16 %v397, %v390
    %v482 = vpack.c.b16 %v405, %v398
    %v483 = vpack.c.b16 %v406, %v399
    %v484 = vpack.c.b16 %v407, %v400
    %v485 = vpack.c.b16 %v408, %v401
    %v486 = vpack.c.b16 %v409, %v402
    %v487 = vpack.c.b16 %v410, %v403
    %v488 = vpack.c.b16 %v411, %v404
    %v489 = vpack.c.b16 %v419, %v412
    %v490 = vpack.c.b16 %v420, %v413
    %v491 = vpack.c.b16 %v421, %v414
    %v492 = vpack.c.b16 %v422, %v415
    %v493 = vpack.c.b16 %v423, %v416
    %v494 = vpack.c.b16 %v424, %v417
    %v495 = vpack.c.b16 %v425, %v418
    %v496 = vpack.c.b16 %v433, %v426
    %v497 = vpack.c.b16 %v434, %v427
    %v498 = vpack.c.b16 %v435, %v428
    %v499 = vpack.c.b16 %v436, %v429
    %v500 = vpack.c.b16 %v437, %v430
    %v501 = vpack.c.b16 %v438, %v431
    %v502 = vpack.c.b16 %v439, %v432
    %v503 = vpack.c.b16 %v447, %v440
    %v504 = vpack.c.b16 %v448, %v441
    %v505 = vpack.c.b16 %v449, %v442
    %v506 = vpack.c.b16 %v450, %v443
    %v507 = vpack.c.b16 %v451, %v444
    %v508 = vpack.c.b16 %v452, %v445
    %v509 = vpack.c.b16 %v453, %v446
    %v678 = vunpack.c.l.b16 %v159
    %v679 = vunpack.c.l.b16 %v160
    %v680 = vunpack.c.l.b16 %v161
    %v681 = vunpack.c.l.b16 %v162
    %v682 = vunpack.c.l.b16 %v163
    %v683 = vunpack.c.l.b16 %v164
    %v684 = vunpack.c.l.b16 %v165
    %v685 = vunpack.c.l.b16 %v166
    %v686 = vunpack.c.l.b16 %v167
    %v687 = vunpack.c.l.b16 %v168
    %v688 = vunpack.c.l.b16 %v169
    %v689 = vunpack.c.l.b16 %v170
    %v690 = vunpack.c.l.b16 %v171
    %v691 = vunpack.c.l.b16 %v172
    %v692 = vunpack.c.l.b16 %v173
    %v693 = vunpack.c.l.b16 %v174
    %v694 = vunpack.c.l.b16 %v175
    %v695 = vunpack.c.l.b16 %v176
    %v696 = vunpack.c.l.b16 %v177
    %v697 = vunpack.c.l.b16 %v178
    %v698 = vunpack.c.l.b16 %v179
    %v699 = vunpack.c.l.b16 %v180
    %v700 = vunpack.c.l.b16 %v181
    %v701 = vunpack.c.l.b16 %v182
    %v702 = vunpack.c.l.b16 %v183
    %v703 = vunpack.c.l.b16 %v184
    %v704 = vunpack.c.l.b16 %v185
    %v705 = vunpack.c.l.b16 %v186
    %v706 = vunpack.c.l.b16 %v187
    %v707 = vunpack.c.l.b16 %v188
    %v708 = vunpack.c.l.b16 %v189
    %v709 = vunpack.c.l.b16 %v190
    %v710 = vunpack.c.l.b16 %v191
    %v711 = vunpack.c.l.b16 %v192
    %v712 = vunpack.c.l.b16 %v193
    %v713 = vunpack.c.l.b16 %v194
    %v714 = vunpack.c.l.b16 %v195
    %v715 = vunpack.c.l.b16 %v196
    %v716 = vunpack.c.l.b16 %v197
    %v717 = vunpack.c.l.b16 %v198
    %v718 = vunpack.c.l.b16 %v199
    %v719 = vunpack.c.l.b16 %v200
    %v720 = vunpack.c.l.b16 %v201
    %v721 = vunpack.c.l.b16 %v202
    %v722 = vunpack.c.l.b16 %v203
    %v723 = vunpack.c.l.b16 %v204
    %v724 = vunpack.c.l.b16 %v205
    %v725 = vunpack.c.l.b16 %v206
    %v726 = vunpack.c.l.b16 %v207
    %v727 = vunpack.c.l.b16 %v208
    %v728 = vunpack.c.l.b16 %v209
    %v729 = vunpack.c.l.b16 %v210
    %v730 = vunpack.c.l.b16 %v211
    %v731 = vunpack.c.l.b16 %v212
    %v732 = vunpack.c.l.b16 %v213
    %v733 = vunpack.c.l.b16 %v214
    %v734 = vunpack.c.l.b16 %v215
    %v735 = vunpack.c.l.b16 %v216
    %v736 = vunpack.c.l.b16 %v217
    %v737 = vunpack.c.l.b16 %v218
    %v738 = vunpack.c.l.b16 %v219
    %v739 = vunpack.c.l.b16 %v220
    %v740 = vunpack.c.l.b16 %v221
    %v741 = vunpack.c.l.b16 %v222
    %v742 = vunpack.c.l.b16 %v223
    %v743 = vunpack.c.l.b16 %v224
    %v744 = vunpack.c.l.b16 %v225
    %v745 = vunpack.c.l.b16 %v226
    %v746 = vunpack.c.l.b16 %v227
    %v747 = vunpack.c.l.b16 %v228
    %v748 = vunpack.c.l.b16 %v229
    %v749 = vunpack.c.l.b16 %v230
    %v750 = vunpack.c.l.b16 %v231
    %v751 = vunpack.c.l.b16 %v232
    %v752 = vunpack.c.l.b16 %v233
    %v753 = vunpack.c.l.b16 %v234
    %v754 = vunpack.c.l.b16 %v235
    %v755 = vunpack.c.l.b16 %v236
    %v756 = vunpack.c.l.b16 %v237
    %v757 = vunpack.c.l.b16 %v238
    %v758 = vunpack.c.l.b16 %v239
    %v759 = vunpack.c.l.b16 %v240
    %v760 = vunpack.c.l.b16 %v241
    %v761 = vunpack.c.l.b16 %v242
    %v762 = vunpack.c.l.b16 %v243
    %v763 = vunpack.c.l.b16 %v244
    %v764 = vunpack.c.l.b16 %v245
    %v765 = vunpack.c.l.b16 %v246
    %v766 = vunpack.c.l.b16 %v247
    %v767 = vunpack.c.l.b16 %v248
    %v768 = vunpack.c.l.b16 %v249
    %v769 = vunpack.c.l.b16 %v250
    %v770 = vunpack.c.l.b16 %v251
    %v771 = vunpack.c.l.b16 %v252
    %v772 = vunpack.c.l.b16 %v253
    %v773 = vunpack.c.l.b16 %v254
    %v774 = vunpack.c.l.b16 %v255
    %v775 = vunpack.c.l.b16 %v256
    %v776 = vunpack.c.l.b16 %v257
    %v777 = vunpack.c.l.b16 %v258
    %v778 = vunpack.c.l.b16 %v259
    %v779 = vunpack.c.l.b16 %v260
    %v780 = vunpack.c.l.b16 %v261
    %v781 = vunpack.c.l.b16 %v262
    %v782 = vunpack.c.l.b16 %v263
    %v783 = vunpack.c.l.b16 %v264
    %v784 = vunpack.c.l.b16 %v265
    %v785 = vunpack.c.l.b16 %v266
    %v786 = vunpack.c.l.b16 %v267
    %v787 = vunpack.c.l.b16 %v268
    %v788 = vunpack.c.l.b16 %v269
    %v789 = vunpack.c.l.b16 %v270
    %v790 = vpack.c.b16 %v679, %v678
    %v791 = vpack.c.b16 %v681, %v680
    %v792 = vpack.c.b16 %v683, %v682
    %v793 = vpack.c.b16 %v685, %v684
    %v794 = vpack.c.b16 %v687, %v686
    %v795 = vpack.c.b16 %v689, %v688
    %v796 = vpack.c.b16 %v691, %v690
    %v797 = vpack.c.b16 %v693, %v692
    %v798 = vpack.c.b16 %v695, %v694
    %v799 = vpack.c.b16 %v697, %v696
    %v800 = vpack.c.b16 %v699, %v698
    %v801 = vpack.c.b16 %v701, %v700
    %v802 = vpack.c.b16 %v703, %v702
    %v803 = vpack.c.b16 %v705, %v704
    %v804 = vpack.c.b16 %v707, %v706
    %v805 = vpack.c.b16 %v709, %v708
    %v806 = vpack.c.b16 %v711, %v710
    %v807 = vpack.c.b16 %v713, %v712
    %v808 = vpack.c.b16 %v715, %v714
    %v809 = vpack.c.b16 %v717, %v716
    %v810 = vpack.c.b16 %v719, %v718
    %v811 = vpack.c.b16 %v721, %v720
    %v812 = vpack.c.b16 %v723, %v722
    %v813 = vpack.c.b16 %v725, %v724
    %v814 = vpack.c.b16 %v727, %v726
    %v815 = vpack.c.b16 %v729, %v728
    %v816 = vpack.c.b16 %v731, %v730
    %v817 = vpack.c.b16 %v733, %v732
    %v818 = vpack.c.b16 %v735, %v734
    %v819 = vpack.c.b16 %v737, %v736
    %v820 = vpack.c.b16 %v739, %v738
    %v821 = vpack.c.b16 %v741, %v740
    %v822 = vpack.c.b16 %v743, %v742
    %v823 = vpack.c.b16 %v745, %v744
    %v824 = vpack.c.b16 %v747, %v746
    %v825 = vpack.c.b16 %v749, %v748
    %v826 = vpack.c.b16 %v751, %v750
    %v827 = vpack.c.b16 %v753, %v752
    %v828 = vpack.c.b16 %v755, %v754
    %v829 = vpack.c.b16 %v757, %v756
    %v830 = vpack.c.b16 %v759, %v758
    %v831 = vpack.c.b16 %v761, %v760
    %v832 = vpack.c.b16 %v763, %v762
    %v833 = vpack.c.b16 %v765, %v764
    %v834 = vpack.c.b16 %v767, %v766
    %v835 = vpack.c.b16 %v769, %v768
    %v836 = vpack.c.b16 %v771, %v770
    %v837 = vpack.c.b16 %v773, %v772
    %v838 = vpack.c.b16 %v775, %v774
    %v839 = vpack.c.b16 %v777, %v776
    %v840 = vpack.c.b16 %v779, %v778
    %v841 = vpack.c.b16 %v781, %v780
    %v842 = vpack.c.b16 %v783, %v782
    %v843 = vpack.c.b16 %v785, %v784
    %v844 = vpack.c.b16 %v787, %v786
    %v845 = vpack.c.b16 %v789, %v788
    %902 = vmatprep.subr.bf16.mxu0 0
    %903 = vmatpush1.bf16.msra.mxu0 %v797
    %904 = vmatprep.subr.bf16.mxu0 0
    %905 = vmatpush1.bf16.msra.mxu0 %v796
    %906 = vmatprep.subr.bf16.mxu0 0
    %907 = vmatpush1.bf16.msra.mxu0 %v795
    %908 = vmatprep.subr.bf16.mxu0 0
    %909 = vmatpush1.bf16.msra.mxu0 %v794
    %910 = vmatprep.subr.bf16.mxu0 0
    %911 = vmatpush1.bf16.msra.mxu0 %v793
    %912 = vmatprep.subr.bf16.mxu0 0
    %913 = vmatpush1.bf16.msra.mxu0 %v792
    %914 = vmatprep.subr.bf16.mxu0 0
    %915 = vmatpush1.bf16.msra.mxu0 %v791
    %916 = vmatprep.subr.bf16.mxu0 0
    %917 = vmatpush1.bf16.msra.mxu0 %v790
    %918 = vmatprep.subr.bf16.mxu0 0
    %919 = vmatpush2.bf16.msra.mxu0 %v805
    %920 = vmatprep.subr.bf16.mxu0 0
    %921 = vmatpush2.bf16.msra.mxu0 %v804
    %922 = vmatprep.subr.bf16.mxu0 0
    %923 = vmatpush2.bf16.msra.mxu0 %v803
    %924 = vmatprep.subr.bf16.mxu0 0
    %925 = vmatpush2.bf16.msra.mxu0 %v802
    %926 = vmatprep.subr.bf16.mxu0 0
    %927 = vmatpush2.bf16.msra.mxu0 %v801
    %928 = vmatprep.subr.bf16.mxu0 0
    %929 = vmatpush2.bf16.msra.mxu0 %v800
    %930 = vmatprep.subr.bf16.mxu0 0
    %931 = vmatpush2.bf16.msra.mxu0 %v799
    %932 = vmatprep.subr.bf16.mxu0 0
    %933 = vmatpush2.bf16.msra.mxu0 %v798
    %934 = vmatprep.mubr.bf16.mxu0 %v455
    %935 = vmatmul.mubr.bf16.gmra.mxu0 %v454
    %v936 = vpop.f32.mrf.mxu0
    %v937 = vadd.f32 %v276, %v936
    %v938 = vpop.f32.mrf.mxu0
    %v939 = vpop.f32.mrf.mxu0
    %v940 = vadd.f32 %v276, %v939
    %v941 = vpop.f32.mrf.mxu0
    %942 = vmatprep.mubr.bf16.mxu0 %v462
    %943 = vmatmul.mubr.bf16.gmra.mxu0 %v461
    %v944 = vpop.f32.mrf.mxu0
    %v945 = vadd.f32 %v276, %v944
    %v946 = vpop.f32.mrf.mxu0
    %v947 = vpop.f32.mrf.mxu0
    %v948 = vadd.f32 %v276, %v947
    %v949 = vpop.f32.mrf.mxu0
    %950 = vmatprep.mubr.bf16.mxu0 %v469
    %951 = vmatmul.mubr.bf16.gmra.mxu0 %v468
    %v952 = vpop.f32.mrf.mxu0
    %v953 = vadd.f32 %v276, %v952
    %v954 = vpop.f32.mrf.mxu0
    %v955 = vpop.f32.mrf.mxu0
    %v956 = vadd.f32 %v276, %v955
    %v957 = vpop.f32.mrf.mxu0
    %958 = vmatprep.mubr.bf16.mxu0 %v476
    %959 = vmatmul.mubr.bf16.gmra.mxu0 %v475
    %v960 = vpop.f32.mrf.mxu0
    %v961 = vadd.f32 %v276, %v960
    %v962 = vpop.f32.mrf.mxu0
    %v963 = vpop.f32.mrf.mxu0
    %v964 = vadd.f32 %v276, %v963
    %v965 = vpop.f32.mrf.mxu0
    %966 = vmatprep.mubr.bf16.mxu0 %v483
    %967 = vmatmul.mubr.bf16.gmra.mxu0 %v482
    %v968 = vpop.f32.mrf.mxu0
    %v969 = vadd.f32 %v276, %v968
    %v970 = vpop.f32.mrf.mxu0
    %v971 = vpop.f32.mrf.mxu0
    %v972 = vadd.f32 %v276, %v971
    %v973 = vpop.f32.mrf.mxu0
    %974 = vmatprep.mubr.bf16.mxu0 %v490
    %975 = vmatmul.mubr.bf16.gmra.mxu0 %v489
    %v976 = vpop.f32.mrf.mxu0
    %v977 = vadd.f32 %v276, %v976
    %v978 = vpop.f32.mrf.mxu0
    %v979 = vpop.f32.mrf.mxu0
    %v980 = vadd.f32 %v276, %v979
    %v981 = vpop.f32.mrf.mxu0
    %982 = vmatprep.mubr.bf16.mxu0 %v497
    %983 = vmatmul.mubr.bf16.gmra.mxu0 %v496
    %v984 = vpop.f32.mrf.mxu0
    %v985 = vadd.f32 %v276, %v984
    %v986 = vpop.f32.mrf.mxu0
    %v987 = vpop.f32.mrf.mxu0
    %v988 = vadd.f32 %v276, %v987
    %v989 = vpop.f32.mrf.mxu0
    %990 = vmatprep.mubr.bf16.mxu0 %v504
    %991 = vmatmul.mubr.bf16.gmra.mxu0 %v503
    %v992 = vpop.f32.mrf.mxu0
    %v993 = vadd.f32 %v276, %v992
    %v994 = vpop.f32.mrf.mxu0
    %v995 = vpop.f32.mrf.mxu0
    %v996 = vadd.f32 %v276, %v995
    %v997 = vpop.f32.mrf.mxu0
    %998 = vdwg.mxu0
    %999 = vmatprep.subr.bf16.mxu0 0
    %1000 = vmatpush1.bf16.msra.mxu0 %v813
    %1001 = vmatprep.subr.bf16.mxu0 0
    %1002 = vmatpush1.bf16.msra.mxu0 %v812
    %1003 = vmatprep.subr.bf16.mxu0 0
    %1004 = vmatpush1.bf16.msra.mxu0 %v811
    %1005 = vmatprep.subr.bf16.mxu0 0
    %1006 = vmatpush1.bf16.msra.mxu0 %v810
    %1007 = vmatprep.subr.bf16.mxu0 0
    %1008 = vmatpush1.bf16.msra.mxu0 %v809
    %1009 = vmatprep.subr.bf16.mxu0 0
    %1010 = vmatpush1.bf16.msra.mxu0 %v808
    %1011 = vmatprep.subr.bf16.mxu0 0
    %1012 = vmatpush1.bf16.msra.mxu0 %v807
    %1013 = vmatprep.subr.bf16.mxu0 0
    %1014 = vmatpush1.bf16.msra.mxu0 %v806
    %1015 = vmatprep.subr.bf16.mxu0 0
    %1016 = vmatpush2.bf16.msra.mxu0 %v821
    %1017 = vmatprep.subr.bf16.mxu0 0
    %1018 = vmatpush2.bf16.msra.mxu0 %v820
    %1019 = vmatprep.subr.bf16.mxu0 0
    %1020 = vmatpush2.bf16.msra.mxu0 %v819
    %1021 = vmatprep.subr.bf16.mxu0 0
    %1022 = vmatpush2.bf16.msra.mxu0 %v818
    %1023 = vmatprep.subr.bf16.mxu0 0
    %1024 = vmatpush2.bf16.msra.mxu0 %v817
    %1025 = vmatprep.subr.bf16.mxu0 0
    %1026 = vmatpush2.bf16.msra.mxu0 %v816
    %1027 = vmatprep.subr.bf16.mxu0 0
    %1028 = vmatpush2.bf16.msra.mxu0 %v815
    %1029 = vmatprep.subr.bf16.mxu0 0
    %1030 = vmatpush2.bf16.msra.mxu0 %v814
    %1031 = vmatprep.mubr.bf16.mxu0 %v457
    %1032 = vmatmul.mubr.bf16.gmra.mxu0 %v456
    %v1033 = vpop.f32.mrf.mxu0
    %v1034 = vadd.f32 %v937, %v1033
    %v1035 = vpop.f32.mrf.mxu0
    %v1036 = vpop.f32.mrf.mxu0
    %v1037 = vadd.f32 %v940, %v1036
    %v1038 = vpop.f32.mrf.mxu0
    %1039 = vmatprep.mubr.bf16.mxu0 %v464
    %1040 = vmatmul.mubr.bf16.gmra.mxu0 %v463
    %v1041 = vpop.f32.mrf.mxu0
    %v1042 = vadd.f32 %v945, %v1041
    %v1043 = vpop.f32.mrf.mxu0
    %v1044 = vpop.f32.mrf.mxu0
    %v1045 = vadd.f32 %v948, %v1044
    %v1046 = vpop.f32.mrf.mxu0
    %1047 = vmatprep.mubr.bf16.mxu0 %v471
    %1048 = vmatmul.mubr.bf16.gmra.mxu0 %v470
    %v1049 = vpop.f32.mrf.mxu0
    %v1050 = vadd.f32 %v953, %v1049
    %v1051 = vpop.f32.mrf.mxu0
    %v1052 = vpop.f32.mrf.mxu0
    %v1053 = vadd.f32 %v956, %v1052
    %v1054 = vpop.f32.mrf.mxu0
    %1055 = vmatprep.mubr.bf16.mxu0 %v478
    %1056 = vmatmul.mubr.bf16.gmra.mxu0 %v477
    %v1057 = vpop.f32.mrf.mxu0
    %v1058 = vadd.f32 %v961, %v1057
    %v1059 = vpop.f32.mrf.mxu0
    %v1060 = vpop.f32.mrf.mxu0
    %v1061 = vadd.f32 %v964, %v1060
    %v1062 = vpop.f32.mrf.mxu0
    %1063 = vmatprep.mubr.bf16.mxu0 %v485
    %1064 = vmatmul.mubr.bf16.gmra.mxu0 %v484
    %v1065 = vpop.f32.mrf.mxu0
    %v1066 = vadd.f32 %v969, %v1065
    %v1067 = vpop.f32.mrf.mxu0
    %v1068 = vpop.f32.mrf.mxu0
    %v1069 = vadd.f32 %v972, %v1068
    %v1070 = vpop.f32.mrf.mxu0
    %1071 = vmatprep.mubr.bf16.mxu0 %v492
    %1072 = vmatmul.mubr.bf16.gmra.mxu0 %v491
    %v1073 = vpop.f32.mrf.mxu0
    %v1074 = vadd.f32 %v977, %v1073
    %v1075 = vpop.f32.mrf.mxu0
    %v1076 = vpop.f32.mrf.mxu0
    %v1077 = vadd.f32 %v980, %v1076
    %v1078 = vpop.f32.mrf.mxu0
    %1079 = vmatprep.mubr.bf16.mxu0 %v499
    %1080 = vmatmul.mubr.bf16.gmra.mxu0 %v498
    %v1081 = vpop.f32.mrf.mxu0
    %v1082 = vadd.f32 %v985, %v1081
    %v1083 = vpop.f32.mrf.mxu0
    %v1084 = vpop.f32.mrf.mxu0
    %v1085 = vadd.f32 %v988, %v1084
    %v1086 = vpop.f32.mrf.mxu0
    %1087 = vmatprep.mubr.bf16.mxu0 %v506
    %1088 = vmatmul.mubr.bf16.gmra.mxu0 %v505
    %v1089 = vpop.f32.mrf.mxu0
    %v1090 = vadd.f32 %v993, %v1089
    %v1091 = vpop.f32.mrf.mxu0
    %v1092 = vpop.f32.mrf.mxu0
    %v1093 = vadd.f32 %v996, %v1092
    %v1094 = vpop.f32.mrf.mxu0
    %1095 = vdwg.mxu0
    %1096 = vmatprep.subr.bf16.mxu0 0
    %1097 = vmatpush1.bf16.msra.mxu0 %v829
    %1098 = vmatprep.subr.bf16.mxu0 0
    %1099 = vmatpush1.bf16.msra.mxu0 %v828
    %1100 = vmatprep.subr.bf16.mxu0 0
    %1101 = vmatpush1.bf16.msra.mxu0 %v827
    %1102 = vmatprep.subr.bf16.mxu0 0
    %1103 = vmatpush1.bf16.msra.mxu0 %v826
    %1104 = vmatprep.subr.bf16.mxu0 0
    %1105 = vmatpush1.bf16.msra.mxu0 %v825
    %1106 = vmatprep.subr.bf16.mxu0 0
    %1107 = vmatpush1.bf16.msra.mxu0 %v824
    %1108 = vmatprep.subr.bf16.mxu0 0
    %1109 = vmatpush1.bf16.msra.mxu0 %v823
    %1110 = vmatprep.subr.bf16.mxu0 0
    %1111 = vmatpush1.bf16.msra.mxu0 %v822
    %1112 = vmatprep.subr.bf16.mxu0 0
    %1113 = vmatpush2.bf16.msra.mxu0 %v837
    %1114 = vmatprep.subr.bf16.mxu0 0
    %1115 = vmatpush2.bf16.msra.mxu0 %v836
    %1116 = vmatprep.subr.bf16.mxu0 0
    %1117 = vmatpush2.bf16.msra.mxu0 %v835
    %1118 = vmatprep.subr.bf16.mxu0 0
    %1119 = vmatpush2.bf16.msra.mxu0 %v834
    %1120 = vmatprep.subr.bf16.mxu0 0
    %1121 = vmatpush2.bf16.msra.mxu0 %v833
    %1122 = vmatprep.subr.bf16.mxu0 0
    %1123 = vmatpush2.bf16.msra.mxu0 %v832
    %1124 = vmatprep.subr.bf16.mxu0 0
    %1125 = vmatpush2.bf16.msra.mxu0 %v831
    %1126 = vmatprep.subr.bf16.mxu0 0
    %1127 = vmatpush2.bf16.msra.mxu0 %v830
    %1128 = vmatprep.mubr.bf16.mxu0 %v459
    %1129 = vmatmul.mubr.bf16.gmra.mxu0 %v458
    %v1130 = vpop.f32.mrf.mxu0
    %v1131 = vadd.f32 %v1034, %v1130
    %v1132 = vpop.f32.mrf.mxu0
    %v1133 = vpop.f32.mrf.mxu0
    %v1134 = vadd.f32 %v1037, %v1133
    %v1135 = vpop.f32.mrf.mxu0
    %1136 = vmatprep.mubr.bf16.mxu0 %v466
    %1137 = vmatmul.mubr.bf16.gmra.mxu0 %v465
    %v1138 = vpop.f32.mrf.mxu0
    %v1139 = vadd.f32 %v1042, %v1138
    %v1140 = vpop.f32.mrf.mxu0
    %v1141 = vpop.f32.mrf.mxu0
    %v1142 = vadd.f32 %v1045, %v1141
    %v1143 = vpop.f32.mrf.mxu0
    %1144 = vmatprep.mubr.bf16.mxu0 %v473
    %1145 = vmatmul.mubr.bf16.gmra.mxu0 %v472
    %v1146 = vpop.f32.mrf.mxu0
    %v1147 = vadd.f32 %v1050, %v1146
    %v1148 = vpop.f32.mrf.mxu0
    %v1149 = vpop.f32.mrf.mxu0
    %v1150 = vadd.f32 %v1053, %v1149
    %v1151 = vpop.f32.mrf.mxu0
    %1152 = vmatprep.mubr.bf16.mxu0 %v480
    %1153 = vmatmul.mubr.bf16.gmra.mxu0 %v479
    %v1154 = vpop.f32.mrf.mxu0
    %v1155 = vadd.f32 %v1058, %v1154
    %v1156 = vpop.f32.mrf.mxu0
    %v1157 = vpop.f32.mrf.mxu0
    %v1158 = vadd.f32 %v1061, %v1157
    %v1159 = vpop.f32.mrf.mxu0
    %1160 = vmatprep.mubr.bf16.mxu0 %v487
    %1161 = vmatmul.mubr.bf16.gmra.mxu0 %v486
    %v1162 = vpop.f32.mrf.mxu0
    %v1163 = vadd.f32 %v1066, %v1162
    %v1164 = vpop.f32.mrf.mxu0
    %v1165 = vpop.f32.mrf.mxu0
    %v1166 = vadd.f32 %v1069, %v1165
    %v1167 = vpop.f32.mrf.mxu0
    %1168 = vmatprep.mubr.bf16.mxu0 %v494
    %1169 = vmatmul.mubr.bf16.gmra.mxu0 %v493
    %v1170 = vpop.f32.mrf.mxu0
    %v1171 = vadd.f32 %v1074, %v1170
    %v1172 = vpop.f32.mrf.mxu0
    %v1173 = vpop.f32.mrf.mxu0
    %v1174 = vadd.f32 %v1077, %v1173
    %v1175 = vpop.f32.mrf.mxu0
    %1176 = vmatprep.mubr.bf16.mxu0 %v501
    %1177 = vmatmul.mubr.bf16.gmra.mxu0 %v500
    %v1178 = vpop.f32.mrf.mxu0
    %v1179 = vadd.f32 %v1082, %v1178
    %v1180 = vpop.f32.mrf.mxu0
    %v1181 = vpop.f32.mrf.mxu0
    %v1182 = vadd.f32 %v1085, %v1181
    %v1183 = vpop.f32.mrf.mxu0
    %1184 = vmatprep.mubr.bf16.mxu0 %v508
    %1185 = vmatmul.mubr.bf16.gmra.mxu0 %v507
    %v1186 = vpop.f32.mrf.mxu0
    %v1187 = vadd.f32 %v1090, %v1186
    %v1188 = vpop.f32.mrf.mxu0
    %v1189 = vpop.f32.mrf.mxu0
    %v1190 = vadd.f32 %v1093, %v1189
    %v1191 = vpop.f32.mrf.mxu0
    %1192 = vdwg.mxu0
    %1193 = vmatprep.subr.bf16.mxu0 0
    %1194 = vmatpush1.bf16.msra.mxu0 %v845
    %1195 = vmatprep.subr.bf16.mxu0 0
    %1196 = vmatpush1.bf16.msra.mxu0 %v844
    %1197 = vmatprep.subr.bf16.mxu0 0
    %1198 = vmatpush1.bf16.msra.mxu0 %v843
    %1199 = vmatprep.subr.bf16.mxu0 0
    %1200 = vmatpush1.bf16.msra.mxu0 %v842
    %1201 = vmatprep.subr.bf16.mxu0 0
    %1202 = vmatpush1.bf16.msra.mxu0 %v841
    %1203 = vmatprep.subr.bf16.mxu0 0
    %1204 = vmatpush1.bf16.msra.mxu0 %v840
    %1205 = vmatprep.subr.bf16.mxu0 0
    %1206 = vmatpush1.bf16.msra.mxu0 %v839
    %1207 = vmatprep.subr.bf16.mxu0 0
    %1208 = vmatpush1.bf16.msra.mxu0 %v838
    %1209 = vmatprep.subr.bf16.mxu0 0
    %1210 = vmatpush2.bf16.msra.mxu0 0
    %1211 = vmatprep.subr.bf16.mxu0 0
    %1212 = vmatpush2.bf16.msra.mxu0 0
    %1213 = vmatprep.subr.bf16.mxu0 0
    %1214 = vmatpush2.bf16.msra.mxu0 0
    %1215 = vmatprep.subr.bf16.mxu0 0
    %1216 = vmatpush2.bf16.msra.mxu0 0
    %1217 = vmatprep.subr.bf16.mxu0 0
    %1218 = vmatpush2.bf16.msra.mxu0 0
    %1219 = vmatprep.subr.bf16.mxu0 0
    %1220 = vmatpush2.bf16.msra.mxu0 0
    %1221 = vmatprep.subr.bf16.mxu0 0
    %1222 = vmatpush2.bf16.msra.mxu0 0
    %1223 = vmatprep.subr.bf16.mxu0 0
    %1224 = vmatpush2.bf16.msra.mxu0 0
    %1225 = vmatprep.mubr.bf16.mxu0 0
    %1226 = vmatmul.mubr.bf16.gmra.mxu0 %v460
    %v1227 = vpop.f32.mrf.mxu0
    %v1228 = vadd.f32 %v1131, %v1227
    %v1229 = vpop.f32.mrf.mxu0
    %v1230 = vpop.f32.mrf.mxu0
    %v1231 = vadd.f32 %v1134, %v1230
    %v1232 = vpop.f32.mrf.mxu0
    %1233 = vmatprep.mubr.bf16.mxu0 0
    %1234 = vmatmul.mubr.bf16.gmra.mxu0 %v467
    %v1235 = vpop.f32.mrf.mxu0
    %v1236 = vadd.f32 %v1139, %v1235
    %v1237 = vpop.f32.mrf.mxu0
    %v1238 = vpop.f32.mrf.mxu0
    %v1239 = vadd.f32 %v1142, %v1238
    %v1240 = vpop.f32.mrf.mxu0
    %1241 = vmatprep.mubr.bf16.mxu0 0
    %1242 = vmatmul.mubr.bf16.gmra.mxu0 %v474
    %v1243 = vpop.f32.mrf.mxu0
    %v1244 = vadd.f32 %v1147, %v1243
    %v1245 = vpop.f32.mrf.mxu0
    %v1246 = vpop.f32.mrf.mxu0
    %v1247 = vadd.f32 %v1150, %v1246
    %v1248 = vpop.f32.mrf.mxu0
    %1249 = vmatprep.mubr.bf16.mxu0 0
    %1250 = vmatmul.mubr.bf16.gmra.mxu0 %v481
    %v1251 = vpop.f32.mrf.mxu0
    %v1252 = vadd.f32 %v1155, %v1251
    %v1253 = vpop.f32.mrf.mxu0
    %v1254 = vpop.f32.mrf.mxu0
    %v1255 = vadd.f32 %v1158, %v1254
    %v1256 = vpop.f32.mrf.mxu0
    %1257 = vmatprep.mubr.bf16.mxu0 0
    %1258 = vmatmul.mubr.bf16.gmra.mxu0 %v488
    %v1259 = vpop.f32.mrf.mxu0
    %v1260 = vadd.f32 %v1163, %v1259
    %v1261 = vpop.f32.mrf.mxu0
    %v1262 = vpop.f32.mrf.mxu0
    %v1263 = vadd.f32 %v1166, %v1262
    %v1264 = vpop.f32.mrf.mxu0
    %1265 = vmatprep.mubr.bf16.mxu0 0
    %1266 = vmatmul.mubr.bf16.gmra.mxu0 %v495
    %v1267 = vpop.f32.mrf.mxu0
    %v1268 = vadd.f32 %v1171, %v1267
    %v1269 = vpop.f32.mrf.mxu0
    %v1270 = vpop.f32.mrf.mxu0
    %v1271 = vadd.f32 %v1174, %v1270
    %v1272 = vpop.f32.mrf.mxu0
    %1273 = vmatprep.mubr.bf16.mxu0 0
    %1274 = vmatmul.mubr.bf16.gmra.mxu0 %v502
    %v1275 = vpop.f32.mrf.mxu0
    %v1276 = vadd.f32 %v1179, %v1275
    %v1277 = vpop.f32.mrf.mxu0
    %v1278 = vpop.f32.mrf.mxu0
    %v1279 = vadd.f32 %v1182, %v1278
    %v1280 = vpop.f32.mrf.mxu0
    %1281 = vmatprep.mubr.bf16.mxu0 0
    %1282 = vmatmul.mubr.bf16.gmra.mxu0 %v509
    %v1283 = vpop.f32.mrf.mxu0
    %v1284 = vadd.f32 %v1187, %v1283
    %v1285 = vpop.f32.mrf.mxu0
    %v1286 = vpop.f32.mrf.mxu0
    %v1287 = vadd.f32 %v1190, %v1286
    %v1288 = vpop.f32.mrf.mxu0
    %1289 = vdwg.mxu0
    %1290 = vst [vmem:[#allocation11] sm:$0xff] %v1228
    %1291 = vst [vmem:[#allocation11 + $0x8] sm:$0xff] %v1231
    %1292 = vst [vmem:[#allocation11 + $0x10] sm:$0xff] %v1236
    %1293 = vst [vmem:[#allocation11 + $0x18] sm:$0xff] %v1239
    %1294 = vst [vmem:[#allocation11 + $0x20] sm:$0xff] %v1244
    %1295 = vst [vmem:[#allocation11 + $0x28] sm:$0xff] %v1247
    %1296 = vst [vmem:[#allocation11 + $0x30] sm:$0xff] %v1252
    %1297 = vst [vmem:[#allocation11 + $0x38] sm:$0xff] %v1255
    %1298 = vst [vmem:[#allocation11 + $0x40] sm:$0xff] %v1260
    %1299 = vst [vmem:[#allocation11 + $0x48] sm:$0xff] %v1263
    %1300 = vst [vmem:[#allocation11 + $0x50] sm:$0xff] %v1268
    %1301 = vst [vmem:[#allocation11 + $0x58] sm:$0xff] %v1271
    %1302 = vst [vmem:[#allocation11 + $0x60] sm:$0xff] %v1276
    %1303 = vst [vmem:[#allocation11 + $0x68] sm:$0xff] %v1279
    %1304 = vst [vmem:[#allocation11 + $0x70] sm:$0xff] %v1284
    %1305 = vst [vmem:[#allocation11 + $0x78] sm:$0xff] %v1287
    %v1306 = vand.u32 2147483647, %v1228
    %v1307 = vand.u32 2147483647, %v1231
    %v1308 = vand.u32 2147483647, %v1236
    %v1309 = vand.u32 2147483647, %v1239
    %v1310 = vand.u32 2147483647, %v1244
    %v1311 = vand.u32 2147483647, %v1247
    %v1312 = vand.u32 2147483647, %v1252
    %v1313 = vand.u32 2147483647, %v1255
    %v1314 = vand.u32 2147483647, %v1260
    %v1315 = vand.u32 2147483647, %v1263
    %v1316 = vand.u32 2147483647, %v1268
    %v1317 = vand.u32 2147483647, %v1271
    %v1318 = vand.u32 2147483647, %v1276
    %v1319 = vand.u32 2147483647, %v1279
    %v1320 = vand.u32 2147483647, %v1284
    %v1321 = vand.u32 2147483647, %v1287
    %v1322 = vadd.f32 %v1306, %v1307
    %v1323 = vadd.f32 %v1322, %v1308
    %v1324 = vadd.f32 %v1323, %v1309
    %v1325 = vadd.f32 %v1324, %v1310
    %v1326 = vadd.f32 %v1325, %v1311
    %v1327 = vadd.f32 %v1326, %v1312
    %v1328 = vadd.f32 %v1327, %v1313
    %v1329 = vadd.f32 %v1328, %v1314
    %v1330 = vadd.f32 %v1329, %v1315
    %v1331 = vadd.f32 %v1330, %v1316
    %v1332 = vadd.f32 %v1331, %v1317
    %v1333 = vadd.f32 %v1332, %v1318
    %v1334 = vadd.f32 %v1333, %v1319
    %v1335 = vadd.f32 %v1334, %v1320
    %v1336 = vadd.f32 %v1335, %v1321
    %1337 = vadd.xlane.f32.xlu0 %v1336
    %v1338 = vpop.xlane.xlu0 %1337
    %v1339 = vrot.slane %v1338, 4
    %v1340 = vadd.f32 %v1338, %v1339
    %v1341 = vrot.slane %v1340, 2
    %v1342 = vadd.f32 %v1340, %v1341
    %v1343 = vrot.slane %v1342, 1
    %v1344 = vadd.f32 %v1342, %v1343
    %s1345 = vtos %v1344
    %s1346 = smul.f32 %s1345, 6.1035156e-05
    %s1347 = smul.f32 %s1346, 0.0031622776
    %v1348 = vld [vmem:[#allocation10] sm:$0xff]
    %v1349 = vld [vmem:[#allocation10 + $0x8] sm:$0xff]
    %v1350 = vld [vmem:[#allocation10 + $0x10] sm:$0xff]
    %v1351 = vld [vmem:[#allocation10 + $0x18] sm:$0xff]
    %v1352 = vld [vmem:[#allocation10 + $0x20] sm:$0xff]
    %v1353 = vld [vmem:[#allocation10 + $0x28] sm:$0xff]
    %v1354 = vld [vmem:[#allocation10 + $0x30] sm:$0xff]
    %v1355 = vld [vmem:[#allocation10 + $0x38] sm:$0xff]
    %v1356 = vld [vmem:[#allocation10 + $0x40] sm:$0xff]
    %v1357 = vld [vmem:[#allocation10 + $0x48] sm:$0xff]
    %v1358 = vld [vmem:[#allocation10 + $0x50] sm:$0xff]
    %v1359 = vld [vmem:[#allocation10 + $0x58] sm:$0xff]
    %v1360 = vld [vmem:[#allocation10 + $0x60] sm:$0xff]
    %v1361 = vld [vmem:[#allocation10 + $0x68] sm:$0xff]
    %v1362 = vld [vmem:[#allocation10 + $0x70] sm:$0xff]
    %v1363 = vld [vmem:[#allocation10 + $0x78] sm:$0xff]
    %v1364 = vstv %s1347
    %v1365 = vmul.f32 %v1348, %v1364
    %v1366 = vmul.f32 %v1349, %v1364
    %v1367 = vmul.f32 %v1350, %v1364
    %v1368 = vmul.f32 %v1351, %v1364
    %v1369 = vmul.f32 %v1352, %v1364
    %v1370 = vmul.f32 %v1353, %v1364
    %v1371 = vmul.f32 %v1354, %v1364
    %v1372 = vmul.f32 %v1355, %v1364
    %v1373 = vmul.f32 %v1356, %v1364
    %v1374 = vmul.f32 %v1357, %v1364
    %v1375 = vmul.f32 %v1358, %v1364
    %v1376 = vmul.f32 %v1359, %v1364
    %v1377 = vmul.f32 %v1360, %v1364
    %v1378 = vmul.f32 %v1361, %v1364
    %v1379 = vmul.f32 %v1362, %v1364
    %v1380 = vmul.f32 %v1363, %v1364
    %v1381 = vadd.f32 %v1228, %v1365
    %v1382 = vadd.f32 %v1231, %v1366
    %v1383 = vadd.f32 %v1236, %v1367
    %v1384 = vadd.f32 %v1239, %v1368
    %v1385 = vadd.f32 %v1244, %v1369
    %v1386 = vadd.f32 %v1247, %v1370
    %v1387 = vadd.f32 %v1252, %v1371
    %v1388 = vadd.f32 %v1255, %v1372
    %v1389 = vadd.f32 %v1260, %v1373
    %v1390 = vadd.f32 %v1263, %v1374
    %v1391 = vadd.f32 %v1268, %v1375
    %v1392 = vadd.f32 %v1271, %v1376
    %v1393 = vadd.f32 %v1276, %v1377
    %v1394 = vadd.f32 %v1279, %v1378
    %v1395 = vadd.f32 %v1284, %v1379
    %v1396 = vadd.f32 %v1287, %v1380
    %1397 = vst [vmem:[#allocation12] sm:$0xff] %v1381
    %1398 = vst [vmem:[#allocation12 + $0x8] sm:$0xff] %v1382
    %1399 = vst [vmem:[#allocation12 + $0x10] sm:$0xff] %v1383
    %1400 = vst [vmem:[#allocation12 + $0x18] sm:$0xff] %v1384
    %1401 = vst [vmem:[#allocation12 + $0x20] sm:$0xff] %v1385
    %1402 = vst [vmem:[#allocation12 + $0x28] sm:$0xff] %v1386
    %1403 = vst [vmem:[#allocation12 + $0x30] sm:$0xff] %v1387
    %1404 = vst [vmem:[#allocation12 + $0x38] sm:$0xff] %v1388
    %1405 = vst [vmem:[#allocation12 + $0x40] sm:$0xff] %v1389
    %1406 = vst [vmem:[#allocation12 + $0x48] sm:$0xff] %v1390
    %1407 = vst [vmem:[#allocation12 + $0x50] sm:$0xff] %v1391
    %1408 = vst [vmem:[#allocation12 + $0x58] sm:$0xff] %v1392
    %1409 = vst [vmem:[#allocation12 + $0x60] sm:$0xff] %v1393
    %1410 = vst [vmem:[#allocation12 + $0x68] sm:$0xff] %v1394
    %1411 = vst [vmem:[#allocation12 + $0x70] sm:$0xff] %v1395
    %1412 = vst [vmem:[#allocation12 + $0x78] sm:$0xff] %v1396
    %v1413 = vpack.c.bf16 %v1382, %v1381
    %v1414 = vpack.c.bf16 %v1384, %v1383
    %v1415 = vpack.c.bf16 %v1386, %v1385
    %v1416 = vpack.c.bf16 %v1388, %v1387
    %v1417 = vpack.c.bf16 %v1390, %v1389
    %v1418 = vpack.c.bf16 %v1392, %v1391
    %v1419 = vpack.c.bf16 %v1394, %v1393
    %v1420 = vpack.c.bf16 %v1396, %v1395
    %v1421 = vld [vmem:[#allocation8] sm:$0xff]
    %v1422 = vld [vmem:[#allocation8 + $0x8] sm:$0xff]
    %v1423 = vld [vmem:[#allocation8 + $0x10] sm:$0xff]
    %v1424 = vld [vmem:[#allocation8 + $0x18] sm:$0xf]
    %v1425 = vld [vmem:[#allocation8 + $0x1c] sm:$0xff]
    %v1426 = vld [vmem:[#allocation8 + $0x24] sm:$0xff]
    %v1427 = vld [vmem:[#allocation8 + $0x2c] sm:$0xff]
    %v1428 = vld [vmem:[#allocation8 + $0x34] sm:$0xf]
    %v1429 = vld [vmem:[#allocation8 + $0x38] sm:$0xff]
    %v1430 = vld [vmem:[#allocation8 + $0x40] sm:$0xff]
    %v1431 = vld [vmem:[#allocation8 + $0x48] sm:$0xff]
    %v1432 = vld [vmem:[#allocation8 + $0x50] sm:$0xf]
    %v1433 = vld [vmem:[#allocation8 + $0x54] sm:$0xff]
    %v1434 = vld [vmem:[#allocation8 + $0x5c] sm:$0xff]
    %v1435 = vld [vmem:[#allocation8 + $0x64] sm:$0xff]
    %v1436 = vld [vmem:[#allocation8 + $0x6c] sm:$0xf]
    %v1437 = vld [vmem:[#allocation8 + $0x70] sm:$0xff]
    %v1438 = vld [vmem:[#allocation8 + $0x78] sm:$0xff]
    %v1439 = vld [vmem:[#allocation8 + $0x80] sm:$0xff]
    %v1440 = vld [vmem:[#allocation8 + $0x88] sm:$0xf]
    %v1441 = vld [vmem:[#allocation8 + $0x8c] sm:$0xff]
    %v1442 = vld [vmem:[#allocation8 + $0x94] sm:$0xff]
    %v1443 = vld [vmem:[#allocation8 + $0x9c] sm:$0xff]
    %v1444 = vld [vmem:[#allocation8 + $0xa4] sm:$0xf]
    %v1445 = vld [vmem:[#allocation8 + $0xa8] sm:$0xff]
    %v1446 = vld [vmem:[#allocation8 + $0xb0] sm:$0xff]
    %v1447 = vld [vmem:[#allocation8 + $0xb8] sm:$0xff]
    %v1448 = vld [vmem:[#allocation8 + $0xc0] sm:$0xf]
    %v1449 = vld [vmem:[#allocation8 + $0xc4] sm:$0xff]
    %v1450 = vld [vmem:[#allocation8 + $0xcc] sm:$0xff]
    %v1451 = vld [vmem:[#allocation8 + $0xd4] sm:$0xff]
    %v1452 = vld [vmem:[#allocation8 + $0xdc] sm:$0xf]
    %v1453 = vld [vmem:[#allocation8 + $0xe0] sm:$0xff]
    %v1454 = vld [vmem:[#allocation8 + $0xe8] sm:$0xff]
    %v1455 = vld [vmem:[#allocation8 + $0xf0] sm:$0xff]
    %v1456 = vld [vmem:[#allocation8 + $0xf8] sm:$0xf]
    %v1457 = vld [vmem:[#allocation8 + $0xfc] sm:$0xff]
    %v1458 = vld [vmem:[#allocation8 + $0x104] sm:$0xff]
    %v1459 = vld [vmem:[#allocation8 + $0x10c] sm:$0xff]
    %v1460 = vld [vmem:[#allocation8 + $0x114] sm:$0xf]
    %v1461 = vld [vmem:[#allocation8 + $0x118] sm:$0xff]
    %v1462 = vld [vmem:[#allocation8 + $0x120] sm:$0xff]
    %v1463 = vld [vmem:[#allocation8 + $0x128] sm:$0xff]
    %v1464 = vld [vmem:[#allocation8 + $0x130] sm:$0xf]
    %v1465 = vld [vmem:[#allocation8 + $0x134] sm:$0xff]
    %v1466 = vld [vmem:[#allocation8 + $0x13c] sm:$0xff]
    %v1467 = vld [vmem:[#allocation8 + $0x144] sm:$0xff]
    %v1468 = vld [vmem:[#allocation8 + $0x14c] sm:$0xf]
    %v1469 = vld [vmem:[#allocation8 + $0x150] sm:$0xff]
    %v1470 = vld [vmem:[#allocation8 + $0x158] sm:$0xff]
    %v1471 = vld [vmem:[#allocation8 + $0x160] sm:$0xff]
    %v1472 = vld [vmem:[#allocation8 + $0x168] sm:$0xf]
    %v1473 = vld [vmem:[#allocation8 + $0x16c] sm:$0xff]
    %v1474 = vld [vmem:[#allocation8 + $0x174] sm:$0xff]
    %v1475 = vld [vmem:[#allocation8 + $0x17c] sm:$0xff]
    %v1476 = vld [vmem:[#allocation8 + $0x184] sm:$0xf]
    %v1477 = vld [vmem:[#allocation8 + $0x188] sm:$0xff]
    %v1478 = vld [vmem:[#allocation8 + $0x190] sm:$0xff]
    %v1479 = vld [vmem:[#allocation8 + $0x198] sm:$0xff]
    %v1480 = vld [vmem:[#allocation8 + $0x1a0] sm:$0xf]
    %v1481 = vld [vmem:[#allocation8 + $0x1a4] sm:$0xff]
    %v1482 = vld [vmem:[#allocation8 + $0x1ac] sm:$0xff]
    %v1483 = vld [vmem:[#allocation8 + $0x1b4] sm:$0xff]
    %v1484 = vld [vmem:[#allocation8 + $0x1bc] sm:$0xf]
    %v1485 = vld [vmem:[%s4] sm:$0xff]
    %v1487 = vlaneseq
    %v1488 = vshrl.u32 %v1487, 7
    %v1489 = vsub.s32 0, %v1488
    %v1490 = vrot.slane %v1485, %v1489
    %v1491 = vlaneseq
    %v1492 = vshrl.u32 %v1491, 7
    %v1493 = vsub.s32 1, %v1492
    %v1494 = vrot.slane %v1485, %v1493
    %v1495 = vlaneseq
    %v1496 = vshrl.u32 %v1495, 7
    %v1497 = vsub.s32 2, %v1496
    %v1498 = vrot.slane %v1485, %v1497
    %v1499 = vlaneseq
    %v1500 = vshrl.u32 %v1499, 7
    %v1501 = vsub.s32 3, %v1500
    %v1502 = vrot.slane %v1485, %v1501
    %v1503 = vlaneseq
    %v1504 = vshrl.u32 %v1503, 7
    %v1505 = vsub.s32 4, %v1504
    %v1506 = vrot.slane %v1485, %v1505
    %v1507 = vlaneseq
    %v1508 = vshrl.u32 %v1507, 7
    %v1509 = vsub.s32 5, %v1508
    %v1510 = vrot.slane %v1485, %v1509
    %v1511 = vlaneseq
    %v1512 = vshrl.u32 %v1511, 7
    %v1513 = vsub.s32 6, %v1512
    %v1514 = vrot.slane %v1485, %v1513
    %v1586 = vunpack.c.l.b16 %v1421
    %v1587 = vunpack.c.h.b16 %v1421
    %v1588 = vunpack.c.l.b16 %v1422
    %v1589 = vunpack.c.h.b16 %v1422
    %v1590 = vunpack.c.l.b16 %v1423
    %v1591 = vunpack.c.h.b16 %v1423
    %v1592 = vunpack.c.l.b16 %v1424
    %v1593 = vunpack.c.l.b16 %v1425
    %v1594 = vunpack.c.h.b16 %v1425
    %v1595 = vunpack.c.l.b16 %v1426
    %v1596 = vunpack.c.h.b16 %v1426
    %v1597 = vunpack.c.l.b16 %v1427
    %v1598 = vunpack.c.h.b16 %v1427
    %v1599 = vunpack.c.l.b16 %v1428
    %v1600 = vunpack.c.l.b16 %v1429
    %v1601 = vunpack.c.h.b16 %v1429
    %v1602 = vunpack.c.l.b16 %v1430
    %v1603 = vunpack.c.h.b16 %v1430
    %v1604 = vunpack.c.l.b16 %v1431
    %v1605 = vunpack.c.h.b16 %v1431
    %v1606 = vunpack.c.l.b16 %v1432
    %v1607 = vunpack.c.l.b16 %v1433
    %v1608 = vunpack.c.h.b16 %v1433
    %v1609 = vunpack.c.l.b16 %v1434
    %v1610 = vunpack.c.h.b16 %v1434
    %v1611 = vunpack.c.l.b16 %v1435
    %v1612 = vunpack.c.h.b16 %v1435
    %v1613 = vunpack.c.l.b16 %v1436
    %v1614 = vunpack.c.l.b16 %v1437
    %v1615 = vunpack.c.h.b16 %v1437
    %v1616 = vunpack.c.l.b16 %v1438
    %v1617 = vunpack.c.h.b16 %v1438
    %v1618 = vunpack.c.l.b16 %v1439
    %v1619 = vunpack.c.h.b16 %v1439
    %v1620 = vunpack.c.l.b16 %v1440
    %v1621 = vunpack.c.l.b16 %v1441
    %v1622 = vunpack.c.h.b16 %v1441
    %v1623 = vunpack.c.l.b16 %v1442
    %v1624 = vunpack.c.h.b16 %v1442
    %v1625 = vunpack.c.l.b16 %v1443
    %v1626 = vunpack.c.h.b16 %v1443
    %v1627 = vunpack.c.l.b16 %v1444
    %v1628 = vunpack.c.l.b16 %v1445
    %v1629 = vunpack.c.h.b16 %v1445
    %v1630 = vunpack.c.l.b16 %v1446
    %v1631 = vunpack.c.h.b16 %v1446
    %v1632 = vunpack.c.l.b16 %v1447
    %v1633 = vunpack.c.h.b16 %v1447
    %v1634 = vunpack.c.l.b16 %v1448
    %v1635 = vunpack.c.l.b16 %v1449
    %v1636 = vunpack.c.h.b16 %v1449
    %v1637 = vunpack.c.l.b16 %v1450
    %v1638 = vunpack.c.h.b16 %v1450
    %v1639 = vunpack.c.l.b16 %v1451
    %v1640 = vunpack.c.h.b16 %v1451
    %v1641 = vunpack.c.l.b16 %v1452
    %v1642 = vunpack.c.l.b16 %v1453
    %v1643 = vunpack.c.h.b16 %v1453
    %v1644 = vunpack.c.l.b16 %v1454
    %v1645 = vunpack.c.h.b16 %v1454
    %v1646 = vunpack.c.l.b16 %v1455
    %v1647 = vunpack.c.h.b16 %v1455
    %v1648 = vunpack.c.l.b16 %v1456
    %v1649 = vunpack.c.l.b16 %v1457
    %v1650 = vunpack.c.h.b16 %v1457
    %v1651 = vunpack.c.l.b16 %v1458
    %v1652 = vunpack.c.h.b16 %v1458
    %v1653 = vunpack.c.l.b16 %v1459
    %v1654 = vunpack.c.h.b16 %v1459
    %v1655 = vunpack.c.l.b16 %v1460
    %v1656 = vunpack.c.l.b16 %v1461
    %v1657 = vunpack.c.h.b16 %v1461
    %v1658 = vunpack.c.l.b16 %v1462
    %v1659 = vunpack.c.h.b16 %v1462
    %v1660 = vunpack.c.l.b16 %v1463
    %v1661 = vunpack.c.h.b16 %v1463
    %v1662 = vunpack.c.l.b16 %v1464
    %v1663 = vunpack.c.l.b16 %v1465
    %v1664 = vunpack.c.h.b16 %v1465
    %v1665 = vunpack.c.l.b16 %v1466
    %v1666 = vunpack.c.h.b16 %v1466
    %v1667 = vunpack.c.l.b16 %v1467
    %v1668 = vunpack.c.h.b16 %v1467
    %v1669 = vunpack.c.l.b16 %v1468
    %v1670 = vunpack.c.l.b16 %v1469
    %v1671 = vunpack.c.h.b16 %v1469
    %v1672 = vunpack.c.l.b16 %v1470
    %v1673 = vunpack.c.h.b16 %v1470
    %v1674 = vunpack.c.l.b16 %v1471
    %v1675 = vunpack.c.h.b16 %v1471
    %v1676 = vunpack.c.l.b16 %v1472
    %v1677 = vunpack.c.l.b16 %v1473
    %v1678 = vunpack.c.h.b16 %v1473
    %v1679 = vunpack.c.l.b16 %v1474
    %v1680 = vunpack.c.h.b16 %v1474
    %v1681 = vunpack.c.l.b16 %v1475
    %v1682 = vunpack.c.h.b16 %v1475
    %v1683 = vunpack.c.l.b16 %v1476
    %v1684 = vunpack.c.l.b16 %v1477
    %v1685 = vunpack.c.h.b16 %v1477
    %v1686 = vunpack.c.l.b16 %v1478
    %v1687 = vunpack.c.h.b16 %v1478
    %v1688 = vunpack.c.l.b16 %v1479
    %v1689 = vunpack.c.h.b16 %v1479
    %v1690 = vunpack.c.l.b16 %v1480
    %v1691 = vunpack.c.l.b16 %v1481
    %v1692 = vunpack.c.h.b16 %v1481
    %v1693 = vunpack.c.l.b16 %v1482
    %v1694 = vunpack.c.h.b16 %v1482
    %v1695 = vunpack.c.l.b16 %v1483
    %v1696 = vunpack.c.h.b16 %v1483
    %v1697 = vunpack.c.l.b16 %v1484
    %v1698 = vpack.c.b16 %v1593, %v1586
    %v1699 = vpack.c.b16 %v1594, %v1587
    %v1700 = vpack.c.b16 %v1595, %v1588
    %v1701 = vpack.c.b16 %v1596, %v1589
    %v1702 = vpack.c.b16 %v1597, %v1590
    %v1703 = vpack.c.b16 %v1598, %v1591
    %v1704 = vpack.c.b16 %v1599, %v1592
    %v1705 = vpack.c.b16 %v1607, %v1600
    %v1706 = vpack.c.b16 %v1608, %v1601
    %v1707 = vpack.c.b16 %v1609, %v1602
    %v1708 = vpack.c.b16 %v1610, %v1603
    %v1709 = vpack.c.b16 %v1611, %v1604
    %v1710 = vpack.c.b16 %v1612, %v1605
    %v1711 = vpack.c.b16 %v1613, %v1606
    %v1712 = vpack.c.b16 %v1621, %v1614
    %v1713 = vpack.c.b16 %v1622, %v1615
    %v1714 = vpack.c.b16 %v1623, %v1616
    %v1715 = vpack.c.b16 %v1624, %v1617
    %v1716 = vpack.c.b16 %v1625, %v1618
    %v1717 = vpack.c.b16 %v1626, %v1619
    %v1718 = vpack.c.b16 %v1627, %v1620
    %v1719 = vpack.c.b16 %v1635, %v1628
    %v1720 = vpack.c.b16 %v1636, %v1629
    %v1721 = vpack.c.b16 %v1637, %v1630
    %v1722 = vpack.c.b16 %v1638, %v1631
    %v1723 = vpack.c.b16 %v1639, %v1632
    %v1724 = vpack.c.b16 %v1640, %v1633
    %v1725 = vpack.c.b16 %v1641, %v1634
    %v1726 = vpack.c.b16 %v1649, %v1642
    %v1727 = vpack.c.b16 %v1650, %v1643
    %v1728 = vpack.c.b16 %v1651, %v1644
    %v1729 = vpack.c.b16 %v1652, %v1645
    %v1730 = vpack.c.b16 %v1653, %v1646
    %v1731 = vpack.c.b16 %v1654, %v1647
    %v1732 = vpack.c.b16 %v1655, %v1648
    %v1733 = vpack.c.b16 %v1663, %v1656
    %v1734 = vpack.c.b16 %v1664, %v1657
    %v1735 = vpack.c.b16 %v1665, %v1658
    %v1736 = vpack.c.b16 %v1666, %v1659
    %v1737 = vpack.c.b16 %v1667, %v1660
    %v1738 = vpack.c.b16 %v1668, %v1661
    %v1739 = vpack.c.b16 %v1669, %v1662
    %v1740 = vpack.c.b16 %v1677, %v1670
    %v1741 = vpack.c.b16 %v1678, %v1671
    %v1742 = vpack.c.b16 %v1679, %v1672
    %v1743 = vpack.c.b16 %v1680, %v1673
    %v1744 = vpack.c.b16 %v1681, %v1674
    %v1745 = vpack.c.b16 %v1682, %v1675
    %v1746 = vpack.c.b16 %v1683, %v1676
    %v1747 = vpack.c.b16 %v1691, %v1684
    %v1748 = vpack.c.b16 %v1692, %v1685
    %v1749 = vpack.c.b16 %v1693, %v1686
    %v1750 = vpack.c.b16 %v1694, %v1687
    %v1751 = vpack.c.b16 %v1695, %v1688
    %v1752 = vpack.c.b16 %v1696, %v1689
    %v1753 = vpack.c.b16 %v1697, %v1690
    %1810 = vmatprep.subr.bf16.mxu0 %v1748
    %1811 = vmatpush1.bf16.msra.mxu0 %v1747
    %1812 = vmatprep.subr.bf16.mxu0 %v1741
    %1813 = vmatpush1.bf16.msra.mxu0 %v1740
    %1814 = vmatprep.subr.bf16.mxu0 %v1734
    %1815 = vmatpush1.bf16.msra.mxu0 %v1733
    %1816 = vmatprep.subr.bf16.mxu0 %v1727
    %1817 = vmatpush1.bf16.msra.mxu0 %v1726
    %1818 = vmatprep.subr.bf16.mxu0 %v1720
    %1819 = vmatpush1.bf16.msra.mxu0 %v1719
    %1820 = vmatprep.subr.bf16.mxu0 %v1713
    %1821 = vmatpush1.bf16.msra.mxu0 %v1712
    %1822 = vmatprep.subr.bf16.mxu0 %v1706
    %1823 = vmatpush1.bf16.msra.mxu0 %v1705
    %1824 = vmatprep.subr.bf16.mxu0 %v1699
    %1825 = vmatpush1.bf16.msra.mxu0 %v1698
    %1826 = vmatprep.subr.bf16.mxu0 0
    %1827 = vmatpush2.bf16.msra.mxu0 0
    %1828 = vmatprep.subr.bf16.mxu0 0
    %1829 = vmatpush2.bf16.msra.mxu0 0
    %1830 = vmatprep.subr.bf16.mxu0 0
    %1831 = vmatpush2.bf16.msra.mxu0 0
    %1832 = vmatprep.subr.bf16.mxu0 0
    %1833 = vmatpush2.bf16.msra.mxu0 0
    %1834 = vmatprep.subr.bf16.mxu0 0
    %1835 = vmatpush2.bf16.msra.mxu0 0
    %1836 = vmatprep.subr.bf16.mxu0 0
    %1837 = vmatpush2.bf16.msra.mxu0 0
    %1838 = vmatprep.subr.bf16.mxu0 0
    %1839 = vmatpush2.bf16.msra.mxu0 0
    %1840 = vmatprep.subr.bf16.mxu0 0
    %1841 = vmatpush2.bf16.msra.mxu0 0
    %1842 = vmatprep.mubr.bf16.mxu0 0
    %1843 = vmatmul.mubr.bf16.gmra.mxu0 %v1413
    %v1844 = vpop.f32.mrf.mxu0
    %v1845 = vadd.f32 %v1490, %v1844
    %v1846 = vpop.f32.mrf.mxu0
    %v1847 = vadd.f32 %v1494, %v1846
    %v1848 = vpop.f32.mrf.mxu0
    %v1849 = vadd.f32 %v1490, %v1848
    %v1850 = vpop.f32.mrf.mxu0
    %v1851 = vadd.f32 %v1494, %v1850
    %1852 = vmatprep.mubr.bf16.mxu0 0
    %1853 = vmatmul.mubr.bf16.gmra.mxu0 %v1414
    %v1854 = vpop.f32.mrf.mxu0
    %v1855 = vadd.f32 %v1490, %v1854
    %v1856 = vpop.f32.mrf.mxu0
    %v1857 = vadd.f32 %v1494, %v1856
    %v1858 = vpop.f32.mrf.mxu0
    %v1859 = vadd.f32 %v1490, %v1858
    %v1860 = vpop.f32.mrf.mxu0
    %v1861 = vadd.f32 %v1494, %v1860
    %1862 = vmatprep.mubr.bf16.mxu0 0
    %1863 = vmatmul.mubr.bf16.gmra.mxu0 %v1415
    %v1864 = vpop.f32.mrf.mxu0
    %v1865 = vadd.f32 %v1490, %v1864
    %v1866 = vpop.f32.mrf.mxu0
    %v1867 = vadd.f32 %v1494, %v1866
    %v1868 = vpop.f32.mrf.mxu0
    %v1869 = vadd.f32 %v1490, %v1868
    %v1870 = vpop.f32.mrf.mxu0
    %v1871 = vadd.f32 %v1494, %v1870
    %1872 = vmatprep.mubr.bf16.mxu0 0
    %1873 = vmatmul.mubr.bf16.gmra.mxu0 %v1416
    %v1874 = vpop.f32.mrf.mxu0
    %v1875 = vadd.f32 %v1490, %v1874
    %v1876 = vpop.f32.mrf.mxu0
    %v1877 = vadd.f32 %v1494, %v1876
    %v1878 = vpop.f32.mrf.mxu0
    %v1879 = vadd.f32 %v1490, %v1878
    %v1880 = vpop.f32.mrf.mxu0
    %v1881 = vadd.f32 %v1494, %v1880
    %1882 = vmatprep.mubr.bf16.mxu0 0
    %1883 = vmatmul.mubr.bf16.gmra.mxu0 %v1417
    %v1884 = vpop.f32.mrf.mxu0
    %v1885 = vadd.f32 %v1490, %v1884
    %v1886 = vpop.f32.mrf.mxu0
    %v1887 = vadd.f32 %v1494, %v1886
    %v1888 = vpop.f32.mrf.mxu0
    %v1889 = vadd.f32 %v1490, %v1888
    %v1890 = vpop.f32.mrf.mxu0
    %v1891 = vadd.f32 %v1494, %v1890
    %1892 = vmatprep.mubr.bf16.mxu0 0
    %1893 = vmatmul.mubr.bf16.gmra.mxu0 %v1418
    %v1894 = vpop.f32.mrf.mxu0
    %v1895 = vadd.f32 %v1490, %v1894
    %v1896 = vpop.f32.mrf.mxu0
    %v1897 = vadd.f32 %v1494, %v1896
    %v1898 = vpop.f32.mrf.mxu0
    %v1899 = vadd.f32 %v1490, %v1898
    %v1900 = vpop.f32.mrf.mxu0
    %v1901 = vadd.f32 %v1494, %v1900
    %1902 = vmatprep.mubr.bf16.mxu0 0
    %1903 = vmatmul.mubr.bf16.gmra.mxu0 %v1419
    %v1904 = vpop.f32.mrf.mxu0
    %v1905 = vadd.f32 %v1490, %v1904
    %v1906 = vpop.f32.mrf.mxu0
    %v1907 = vadd.f32 %v1494, %v1906
    %v1908 = vpop.f32.mrf.mxu0
    %v1909 = vadd.f32 %v1490, %v1908
    %v1910 = vpop.f32.mrf.mxu0
    %v1911 = vadd.f32 %v1494, %v1910
    %1912 = vmatprep.mubr.bf16.mxu0 0
    %1913 = vmatmul.mubr.bf16.gmra.mxu0 %v1420
    %v1914 = vpop.f32.mrf.mxu0
    %v1915 = vadd.f32 %v1490, %v1914
    %v1916 = vpop.f32.mrf.mxu0
    %v1917 = vadd.f32 %v1494, %v1916
    %v1918 = vpop.f32.mrf.mxu0
    %v1919 = vadd.f32 %v1490, %v1918
    %v1920 = vpop.f32.mrf.mxu0
    %v1921 = vadd.f32 %v1494, %v1920
    %1922 = vdwg.mxu0
    %1923 = vmatprep.subr.bf16.mxu0 %v1750
    %1924 = vmatpush1.bf16.msra.mxu0 %v1749
    %1925 = vmatprep.subr.bf16.mxu0 %v1743
    %1926 = vmatpush1.bf16.msra.mxu0 %v1742
    %1927 = vmatprep.subr.bf16.mxu0 %v1736
    %1928 = vmatpush1.bf16.msra.mxu0 %v1735
    %1929 = vmatprep.subr.bf16.mxu0 %v1729
    %1930 = vmatpush1.bf16.msra.mxu0 %v1728
    %1931 = vmatprep.subr.bf16.mxu0 %v1722
    %1932 = vmatpush1.bf16.msra.mxu0 %v1721
    %1933 = vmatprep.subr.bf16.mxu0 %v1715
    %1934 = vmatpush1.bf16.msra.mxu0 %v1714
    %1935 = vmatprep.subr.bf16.mxu0 %v1708
    %1936 = vmatpush1.bf16.msra.mxu0 %v1707
    %1937 = vmatprep.subr.bf16.mxu0 %v1701
    %1938 = vmatpush1.bf16.msra.mxu0 %v1700
    %1939 = vmatprep.subr.bf16.mxu0 0
    %1940 = vmatpush2.bf16.msra.mxu0 0
    %1941 = vmatprep.subr.bf16.mxu0 0
    %1942 = vmatpush2.bf16.msra.mxu0 0
    %1943 = vmatprep.subr.bf16.mxu0 0
    %1944 = vmatpush2.bf16.msra.mxu0 0
    %1945 = vmatprep.subr.bf16.mxu0 0
    %1946 = vmatpush2.bf16.msra.mxu0 0
    %1947 = vmatprep.subr.bf16.mxu0 0
    %1948 = vmatpush2.bf16.msra.mxu0 0
    %1949 = vmatprep.subr.bf16.mxu0 0
    %1950 = vmatpush2.bf16.msra.mxu0 0
    %1951 = vmatprep.subr.bf16.mxu0 0
    %1952 = vmatpush2.bf16.msra.mxu0 0
    %1953 = vmatprep.subr.bf16.mxu0 0
    %1954 = vmatpush2.bf16.msra.mxu0 0
    %1955 = vmatprep.mubr.bf16.mxu0 0
    %1956 = vmatmul.mubr.bf16.gmra.mxu0 %v1413
    %v1957 = vpop.f32.mrf.mxu0
    %v1958 = vadd.f32 %v1498, %v1957
    %v1959 = vpop.f32.mrf.mxu0
    %v1960 = vadd.f32 %v1502, %v1959
    %v1961 = vpop.f32.mrf.mxu0
    %v1962 = vadd.f32 %v1498, %v1961
    %v1963 = vpop.f32.mrf.mxu0
    %v1964 = vadd.f32 %v1502, %v1963
    %1965 = vmatprep.mubr.bf16.mxu0 0
    %1966 = vmatmul.mubr.bf16.gmra.mxu0 %v1414
    %v1967 = vpop.f32.mrf.mxu0
    %v1968 = vadd.f32 %v1498, %v1967
    %v1969 = vpop.f32.mrf.mxu0
    %v1970 = vadd.f32 %v1502, %v1969
    %v1971 = vpop.f32.mrf.mxu0
    %v1972 = vadd.f32 %v1498, %v1971
    %v1973 = vpop.f32.mrf.mxu0
    %v1974 = vadd.f32 %v1502, %v1973
    %1975 = vmatprep.mubr.bf16.mxu0 0
    %1976 = vmatmul.mubr.bf16.gmra.mxu0 %v1415
    %v1977 = vpop.f32.mrf.mxu0
    %v1978 = vadd.f32 %v1498, %v1977
    %v1979 = vpop.f32.mrf.mxu0
    %v1980 = vadd.f32 %v1502, %v1979
    %v1981 = vpop.f32.mrf.mxu0
    %v1982 = vadd.f32 %v1498, %v1981
    %v1983 = vpop.f32.mrf.mxu0
    %v1984 = vadd.f32 %v1502, %v1983
    %1985 = vmatprep.mubr.bf16.mxu0 0
    %1986 = vmatmul.mubr.bf16.gmra.mxu0 %v1416
    %v1987 = vpop.f32.mrf.mxu0
    %v1988 = vadd.f32 %v1498, %v1987
    %v1989 = vpop.f32.mrf.mxu0
    %v1990 = vadd.f32 %v1502, %v1989
    %v1991 = vpop.f32.mrf.mxu0
    %v1992 = vadd.f32 %v1498, %v1991
    %v1993 = vpop.f32.mrf.mxu0
    %v1994 = vadd.f32 %v1502, %v1993
    %1995 = vmatprep.mubr.bf16.mxu0 0
    %1996 = vmatmul.mubr.bf16.gmra.mxu0 %v1417
    %v1997 = vpop.f32.mrf.mxu0
    %v1998 = vadd.f32 %v1498, %v1997
    %v1999 = vpop.f32.mrf.mxu0
    %v2000 = vadd.f32 %v1502, %v1999
    %v2001 = vpop.f32.mrf.mxu0
    %v2002 = vadd.f32 %v1498, %v2001
    %v2003 = vpop.f32.mrf.mxu0
    %v2004 = vadd.f32 %v1502, %v2003
    %2005 = vmatprep.mubr.bf16.mxu0 0
    %2006 = vmatmul.mubr.bf16.gmra.mxu0 %v1418
    %v2007 = vpop.f32.mrf.mxu0
    %v2008 = vadd.f32 %v1498, %v2007
    %v2009 = vpop.f32.mrf.mxu0
    %v2010 = vadd.f32 %v1502, %v2009
    %v2011 = vpop.f32.mrf.mxu0
    %v2012 = vadd.f32 %v1498, %v2011
    %v2013 = vpop.f32.mrf.mxu0
    %v2014 = vadd.f32 %v1502, %v2013
    %2015 = vmatprep.mubr.bf16.mxu0 0
    %2016 = vmatmul.mubr.bf16.gmra.mxu0 %v1419
    %v2017 = vpop.f32.mrf.mxu0
    %v2018 = vadd.f32 %v1498, %v2017
    %v2019 = vpop.f32.mrf.mxu0
    %v2020 = vadd.f32 %v1502, %v2019
    %v2021 = vpop.f32.mrf.mxu0
    %v2022 = vadd.f32 %v1498, %v2021
    %v2023 = vpop.f32.mrf.mxu0
    %v2024 = vadd.f32 %v1502, %v2023
    %2025 = vmatprep.mubr.bf16.mxu0 0
    %2026 = vmatmul.mubr.bf16.gmra.mxu0 %v1420
    %v2027 = vpop.f32.mrf.mxu0
    %v2028 = vadd.f32 %v1498, %v2027
    %v2029 = vpop.f32.mrf.mxu0
    %v2030 = vadd.f32 %v1502, %v2029
    %v2031 = vpop.f32.mrf.mxu0
    %v2032 = vadd.f32 %v1498, %v2031
    %v2033 = vpop.f32.mrf.mxu0
    %v2034 = vadd.f32 %v1502, %v2033
    %2035 = vdwg.mxu0
    %2036 = vmatprep.subr.bf16.mxu0 %v1752
    %2037 = vmatpush1.bf16.msra.mxu0 %v1751
    %2038 = vmatprep.subr.bf16.mxu0 %v1745
    %2039 = vmatpush1.bf16.msra.mxu0 %v1744
    %2040 = vmatprep.subr.bf16.mxu0 %v1738
    %2041 = vmatpush1.bf16.msra.mxu0 %v1737
    %2042 = vmatprep.subr.bf16.mxu0 %v1731
    %2043 = vmatpush1.bf16.msra.mxu0 %v1730
    %2044 = vmatprep.subr.bf16.mxu0 %v1724
    %2045 = vmatpush1.bf16.msra.mxu0 %v1723
    %2046 = vmatprep.subr.bf16.mxu0 %v1717
    %2047 = vmatpush1.bf16.msra.mxu0 %v1716
    %2048 = vmatprep.subr.bf16.mxu0 %v1710
    %2049 = vmatpush1.bf16.msra.mxu0 %v1709
    %2050 = vmatprep.subr.bf16.mxu0 %v1703
    %2051 = vmatpush1.bf16.msra.mxu0 %v1702
    %2052 = vmatprep.subr.bf16.mxu0 0
    %2053 = vmatpush2.bf16.msra.mxu0 0
    %2054 = vmatprep.subr.bf16.mxu0 0
    %2055 = vmatpush2.bf16.msra.mxu0 0
    %2056 = vmatprep.subr.bf16.mxu0 0
    %2057 = vmatpush2.bf16.msra.mxu0 0
    %2058 = vmatprep.subr.bf16.mxu0 0
    %2059 = vmatpush2.bf16.msra.mxu0 0
    %2060 = vmatprep.subr.bf16.mxu0 0
    %2061 = vmatpush2.bf16.msra.mxu0 0
    %2062 = vmatprep.subr.bf16.mxu0 0
    %2063 = vmatpush2.bf16.msra.mxu0 0
    %2064 = vmatprep.subr.bf16.mxu0 0
    %2065 = vmatpush2.bf16.msra.mxu0 0
    %2066 = vmatprep.subr.bf16.mxu0 0
    %2067 = vmatpush2.bf16.msra.mxu0 0
    %2068 = vmatprep.mubr.bf16.mxu0 0
    %2069 = vmatmul.mubr.bf16.gmra.mxu0 %v1413
    %v2070 = vpop.f32.mrf.mxu0
    %v2071 = vadd.f32 %v1506, %v2070
    %v2072 = vpop.f32.mrf.mxu0
    %v2073 = vadd.f32 %v1510, %v2072
    %v2074 = vpop.f32.mrf.mxu0
    %v2075 = vadd.f32 %v1506, %v2074
    %v2076 = vpop.f32.mrf.mxu0
    %v2077 = vadd.f32 %v1510, %v2076
    %2078 = vmatprep.mubr.bf16.mxu0 0
    %2079 = vmatmul.mubr.bf16.gmra.mxu0 %v1414
    %v2080 = vpop.f32.mrf.mxu0
    %v2081 = vadd.f32 %v1506, %v2080
    %v2082 = vpop.f32.mrf.mxu0
    %v2083 = vadd.f32 %v1510, %v2082
    %v2084 = vpop.f32.mrf.mxu0
    %v2085 = vadd.f32 %v1506, %v2084
    %v2086 = vpop.f32.mrf.mxu0
    %v2087 = vadd.f32 %v1510, %v2086
    %2088 = vmatprep.mubr.bf16.mxu0 0
    %2089 = vmatmul.mubr.bf16.gmra.mxu0 %v1415
    %v2090 = vpop.f32.mrf.mxu0
    %v2091 = vadd.f32 %v1506, %v2090
    %v2092 = vpop.f32.mrf.mxu0
    %v2093 = vadd.f32 %v1510, %v2092
    %v2094 = vpop.f32.mrf.mxu0
    %v2095 = vadd.f32 %v1506, %v2094
    %v2096 = vpop.f32.mrf.mxu0
    %v2097 = vadd.f32 %v1510, %v2096
    %2098 = vmatprep.mubr.bf16.mxu0 0
    %2099 = vmatmul.mubr.bf16.gmra.mxu0 %v1416
    %v2100 = vpop.f32.mrf.mxu0
    %v2101 = vadd.f32 %v1506, %v2100
    %v2102 = vpop.f32.mrf.mxu0
    %v2103 = vadd.f32 %v1510, %v2102
    %v2104 = vpop.f32.mrf.mxu0
    %v2105 = vadd.f32 %v1506, %v2104
    %v2106 = vpop.f32.mrf.mxu0
    %v2107 = vadd.f32 %v1510, %v2106
    %2108 = vmatprep.mubr.bf16.mxu0 0
    %2109 = vmatmul.mubr.bf16.gmra.mxu0 %v1417
    %v2110 = vpop.f32.mrf.mxu0
    %v2111 = vadd.f32 %v1506, %v2110
    %v2112 = vpop.f32.mrf.mxu0
    %v2113 = vadd.f32 %v1510, %v2112
    %v2114 = vpop.f32.mrf.mxu0
    %v2115 = vadd.f32 %v1506, %v2114
    %v2116 = vpop.f32.mrf.mxu0
    %v2117 = vadd.f32 %v1510, %v2116
    %2118 = vmatprep.mubr.bf16.mxu0 0
    %2119 = vmatmul.mubr.bf16.gmra.mxu0 %v1418
    %v2120 = vpop.f32.mrf.mxu0
    %v2121 = vadd.f32 %v1506, %v2120
    %v2122 = vpop.f32.mrf.mxu0
    %v2123 = vadd.f32 %v1510, %v2122
    %v2124 = vpop.f32.mrf.mxu0
    %v2125 = vadd.f32 %v1506, %v2124
    %v2126 = vpop.f32.mrf.mxu0
    %v2127 = vadd.f32 %v1510, %v2126
    %2128 = vmatprep.mubr.bf16.mxu0 0
    %2129 = vmatmul.mubr.bf16.gmra.mxu0 %v1419
    %v2130 = vpop.f32.mrf.mxu0
    %v2131 = vadd.f32 %v1506, %v2130
    %v2132 = vpop.f32.mrf.mxu0
    %v2133 = vadd.f32 %v1510, %v2132
    %v2134 = vpop.f32.mrf.mxu0
    %v2135 = vadd.f32 %v1506, %v2134
    %v2136 = vpop.f32.mrf.mxu0
    %v2137 = vadd.f32 %v1510, %v2136
    %2138 = vmatprep.mubr.bf16.mxu0 0
    %2139 = vmatmul.mubr.bf16.gmra.mxu0 %v1420
    %v2140 = vpop.f32.mrf.mxu0
    %v2141 = vadd.f32 %v1506, %v2140
    %v2142 = vpop.f32.mrf.mxu0
    %v2143 = vadd.f32 %v1510, %v2142
    %v2144 = vpop.f32.mrf.mxu0
    %v2145 = vadd.f32 %v1506, %v2144
    %v2146 = vpop.f32.mrf.mxu0
    %v2147 = vadd.f32 %v1510, %v2146
    %2148 = vdwg.mxu0
    %2149 = vmatprep.subr.bf16.mxu0 0
    %2150 = vmatpush1.bf16.msra.mxu0 %v1753
    %2151 = vmatprep.subr.bf16.mxu0 0
    %2152 = vmatpush1.bf16.msra.mxu0 %v1746
    %2153 = vmatprep.subr.bf16.mxu0 0
    %2154 = vmatpush1.bf16.msra.mxu0 %v1739
    %2155 = vmatprep.subr.bf16.mxu0 0
    %2156 = vmatpush1.bf16.msra.mxu0 %v1732
    %2157 = vmatprep.subr.bf16.mxu0 0
    %2158 = vmatpush1.bf16.msra.mxu0 %v1725
    %2159 = vmatprep.subr.bf16.mxu0 0
    %2160 = vmatpush1.bf16.msra.mxu0 %v1718
    %2161 = vmatprep.subr.bf16.mxu0 0
    %2162 = vmatpush1.bf16.msra.mxu0 %v1711
    %2163 = vmatprep.subr.bf16.mxu0 0
    %2164 = vmatpush1.bf16.msra.mxu0 %v1704
    %2165 = vmatprep.subr.bf16.mxu0 0
    %2166 = vmatpush2.bf16.msra.mxu0 0
    %2167 = vmatprep.subr.bf16.mxu0 0
    %2168 = vmatpush2.bf16.msra.mxu0 0
    %2169 = vmatprep.subr.bf16.mxu0 0
    %2170 = vmatpush2.bf16.msra.mxu0 0
    %2171 = vmatprep.subr.bf16.mxu0 0
    %2172 = vmatpush2.bf16.msra.mxu0 0
    %2173 = vmatprep.subr.bf16.mxu0 0
    %2174 = vmatpush2.bf16.msra.mxu0 0
    %2175 = vmatprep.subr.bf16.mxu0 0
    %2176 = vmatpush2.bf16.msra.mxu0 0
    %2177 = vmatprep.subr.bf16.mxu0 0
    %2178 = vmatpush2.bf16.msra.mxu0 0
    %2179 = vmatprep.subr.bf16.mxu0 0
    %2180 = vmatpush2.bf16.msra.mxu0 0
    %2181 = vmatprep.mubr.bf16.mxu0 0
    %2182 = vmatmul.mubr.bf16.gmra.mxu0 %v1413
    %v2183 = vpop.f32.mrf.mxu0
    %v2184 = vadd.f32 %v1514, %v2183
    %v2185 = vpop.f32.mrf.mxu0
    %v2186 = vpop.f32.mrf.mxu0
    %v2187 = vadd.f32 %v1514, %v2186
    %v2188 = vpop.f32.mrf.mxu0
    %2189 = vmatprep.mubr.bf16.mxu0 0
    %2190 = vmatmul.mubr.bf16.gmra.mxu0 %v1414
    %v2191 = vpop.f32.mrf.mxu0
    %v2192 = vadd.f32 %v1514, %v2191
    %v2193 = vpop.f32.mrf.mxu0
    %v2194 = vpop.f32.mrf.mxu0
    %v2195 = vadd.f32 %v1514, %v2194
    %v2196 = vpop.f32.mrf.mxu0
    %2197 = vmatprep.mubr.bf16.mxu0 0
    %2198 = vmatmul.mubr.bf16.gmra.mxu0 %v1415
    %v2199 = vpop.f32.mrf.mxu0
    %v2200 = vadd.f32 %v1514, %v2199
    %v2201 = vpop.f32.mrf.mxu0
    %v2202 = vpop.f32.mrf.mxu0
    %v2203 = vadd.f32 %v1514, %v2202
    %v2204 = vpop.f32.mrf.mxu0
    %2205 = vmatprep.mubr.bf16.mxu0 0
    %2206 = vmatmul.mubr.bf16.gmra.mxu0 %v1416
    %v2207 = vpop.f32.mrf.mxu0
    %v2208 = vadd.f32 %v1514, %v2207
    %v2209 = vpop.f32.mrf.mxu0
    %v2210 = vpop.f32.mrf.mxu0
    %v2211 = vadd.f32 %v1514, %v2210
    %v2212 = vpop.f32.mrf.mxu0
    %2213 = vmatprep.mubr.bf16.mxu0 0
    %2214 = vmatmul.mubr.bf16.gmra.mxu0 %v1417
    %v2215 = vpop.f32.mrf.mxu0
    %v2216 = vadd.f32 %v1514, %v2215
    %v2217 = vpop.f32.mrf.mxu0
    %v2218 = vpop.f32.mrf.mxu0
    %v2219 = vadd.f32 %v1514, %v2218
    %v2220 = vpop.f32.mrf.mxu0
    %2221 = vmatprep.mubr.bf16.mxu0 0
    %2222 = vmatmul.mubr.bf16.gmra.mxu0 %v1418
    %v2223 = vpop.f32.mrf.mxu0
    %v2224 = vadd.f32 %v1514, %v2223
    %v2225 = vpop.f32.mrf.mxu0
    %v2226 = vpop.f32.mrf.mxu0
    %v2227 = vadd.f32 %v1514, %v2226
    %v2228 = vpop.f32.mrf.mxu0
    %2229 = vmatprep.mubr.bf16.mxu0 0
    %2230 = vmatmul.mubr.bf16.gmra.mxu0 %v1419
    %v2231 = vpop.f32.mrf.mxu0
    %v2232 = vadd.f32 %v1514, %v2231
    %v2233 = vpop.f32.mrf.mxu0
    %v2234 = vpop.f32.mrf.mxu0
    %v2235 = vadd.f32 %v1514, %v2234
    %v2236 = vpop.f32.mrf.mxu0
    %2237 = vmatprep.mubr.bf16.mxu0 0
    %2238 = vmatmul.mubr.bf16.gmra.mxu0 %v1420
    %v2239 = vpop.f32.mrf.mxu0
    %v2240 = vadd.f32 %v1514, %v2239
    %v2241 = vpop.f32.mrf.mxu0
    %v2242 = vpop.f32.mrf.mxu0
    %v2243 = vadd.f32 %v1514, %v2242
    %v2244 = vpop.f32.mrf.mxu0
    %2245 = vdwg.mxu0
    %2246 = vst [vmem:[#allocation14] sm:$0xff] %v1845
    %2247 = vst [vmem:[#allocation14 + $0x8] sm:$0xff] %v1847
    %2248 = vst [vmem:[#allocation14 + $0x10] sm:$0xff] %v1958
    %2249 = vst [vmem:[#allocation14 + $0x18] sm:$0xff] %v1960
    %2250 = vst [vmem:[#allocation14 + $0x20] sm:$0xff] %v2071
    %2251 = vst [vmem:[#allocation14 + $0x28] sm:$0xff] %v2073
    %2252 = vst [vmem:[#allocation14 + $0x30] sm:$0xff] %v2184
    %2253 = vst [vmem:[#allocation14 + $0x38] sm:$0xff] %v1849
    %2254 = vst [vmem:[#allocation14 + $0x40] sm:$0xff] %v1851
    %2255 = vst [vmem:[#allocation14 + $0x48] sm:$0xff] %v1962
    %2256 = vst [vmem:[#allocation14 + $0x50] sm:$0xff] %v1964
    %2257 = vst [vmem:[#allocation14 + $0x58] sm:$0xff] %v2075
    %2258 = vst [vmem:[#allocation14 + $0x60] sm:$0xff] %v2077
    %2259 = vst [vmem:[#allocation14 + $0x68] sm:$0xff] %v2187
    %2260 = vst [vmem:[#allocation14 + $0x70] sm:$0xff] %v1855
    %2261 = vst [vmem:[#allocation14 + $0x78] sm:$0xff] %v1857
    %2262 = vst [vmem:[#allocation14 + $0x80] sm:$0xff] %v1968
    %2263 = vst [vmem:[#allocation14 + $0x88] sm:$0xff] %v1970
    %2264 = vst [vmem:[#allocation14 + $0x90] sm:$0xff] %v2081
    %2265 = vst [vmem:[#allocation14 + $0x98] sm:$0xff] %v2083
    %2266 = vst [vmem:[#allocation14 + $0xa0] sm:$0xff] %v2192
    %2267 = vst [vmem:[#allocation14 + $0xa8] sm:$0xff] %v1859
    %2268 = vst [vmem:[#allocation14 + $0xb0] sm:$0xff] %v1861
    %2269 = vst [vmem:[#allocation14 + $0xb8] sm:$0xff] %v1972
    %2270 = vst [vmem:[#allocation14 + $0xc0] sm:$0xff] %v1974
    %2271 = vst [vmem:[#allocation14 + $0xc8] sm:$0xff] %v2085
    %2272 = vst [vmem:[#allocation14 + $0xd0] sm:$0xff] %v2087
    %2273 = vst [vmem:[#allocation14 + $0xd8] sm:$0xff] %v2195
    %2274 = vst [vmem:[#allocation14 + $0xe0] sm:$0xff] %v1865
    %2275 = vst [vmem:[#allocation14 + $0xe8] sm:$0xff] %v1867
    %2276 = vst [vmem:[#allocation14 + $0xf0] sm:$0xff] %v1978
    %2277 = vst [vmem:[#allocation14 + $0xf8] sm:$0xff] %v1980
    %2278 = vst [vmem:[#allocation14 + $0x100] sm:$0xff] %v2091
    %2279 = vst [vmem:[#allocation14 + $0x108] sm:$0xff] %v2093
    %2280 = vst [vmem:[#allocation14 + $0x110] sm:$0xff] %v2200
    %2281 = vst [vmem:[#allocation14 + $0x118] sm:$0xff] %v1869
    %2282 = vst [vmem:[#allocation14 + $0x120] sm:$0xff] %v1871
    %2283 = vst [vmem:[#allocation14 + $0x128] sm:$0xff] %v1982
    %2284 = vst [vmem:[#allocation14 + $0x130] sm:$0xff] %v1984
    %2285 = vst [vmem:[#allocation14 + $0x138] sm:$0xff] %v2095
    %2286 = vst [vmem:[#allocation14 + $0x140] sm:$0xff] %v2097
    %2287 = vst [vmem:[#allocation14 + $0x148] sm:$0xff] %v2203
    %2288 = vst [vmem:[#allocation14 + $0x150] sm:$0xff] %v1875
    %2289 = vst [vmem:[#allocation14 + $0x158] sm:$0xff] %v1877
    %2290 = vst [vmem:[#allocation14 + $0x160] sm:$0xff] %v1988
    %2291 = vst [vmem:[#allocation14 + $0x168] sm:$0xff] %v1990
    %2292 = vst [vmem:[#allocation14 + $0x170] sm:$0xff] %v2101
    %2293 = vst [vmem:[#allocation14 + $0x178] sm:$0xff] %v2103
    %2294 = vst [vmem:[#allocation14 + $0x180] sm:$0xff] %v2208
    %2295 = vst [vmem:[#allocation14 + $0x188] sm:$0xff] %v1879
    %2296 = vst [vmem:[#allocation14 + $0x190] sm:$0xff] %v1881
    %2297 = vst [vmem:[#allocation14 + $0x198] sm:$0xff] %v1992
    %2298 = vst [vmem:[#allocation14 + $0x1a0] sm:$0xff] %v1994
    %2299 = vst [vmem:[#allocation14 + $0x1a8] sm:$0xff] %v2105
    %2300 = vst [vmem:[#allocation14 + $0x1b0] sm:$0xff] %v2107
    %2301 = vst [vmem:[#allocation14 + $0x1b8] sm:$0xff] %v2211
    %2302 = vst [vmem:[#allocation14 + $0x1c0] sm:$0xff] %v1885
    %2303 = vst [vmem:[#allocation14 + $0x1c8] sm:$0xff] %v1887
    %2304 = vst [vmem:[#allocation14 + $0x1d0] sm:$0xff] %v1998
    %2305 = vst [vmem:[#allocation14 + $0x1d8] sm:$0xff] %v2000
    %2306 = vst [vmem:[#allocation14 + $0x1e0] sm:$0xff] %v2111
    %2307 = vst [vmem:[#allocation14 + $0x1e8] sm:$0xff] %v2113
    %2308 = vst [vmem:[#allocation14 + $0x1f0] sm:$0xff] %v2216
    %2309 = vst [vmem:[#allocation14 + $0x1f8] sm:$0xff] %v1889
    %2310 = vst [vmem:[#allocation14 + $0x200] sm:$0xff] %v1891
    %2311 = vst [vmem:[#allocation14 + $0x208] sm:$0xff] %v2002
    %2312 = vst [vmem:[#allocation14 + $0x210] sm:$0xff] %v2004
    %2313 = vst [vmem:[#allocation14 + $0x218] sm:$0xff] %v2115
    %2314 = vst [vmem:[#allocation14 + $0x220] sm:$0xff] %v2117
    %2315 = vst [vmem:[#allocation14 + $0x228] sm:$0xff] %v2219
    %2316 = vst [vmem:[#allocation14 + $0x230] sm:$0xff] %v1895
    %2317 = vst [vmem:[#allocation14 + $0x238] sm:$0xff] %v1897
    %2318 = vst [vmem:[#allocation14 + $0x240] sm:$0xff] %v2008
    %2319 = vst [vmem:[#allocation14 + $0x248] sm:$0xff] %v2010
    %2320 = vst [vmem:[#allocation14 + $0x250] sm:$0xff] %v2121
    %2321 = vst [vmem:[#allocation14 + $0x258] sm:$0xff] %v2123
    %2322 = vst [vmem:[#allocation14 + $0x260] sm:$0xff] %v2224
    %2323 = vst [vmem:[#allocation14 + $0x268] sm:$0xff] %v1899
    %2324 = vst [vmem:[#allocation14 + $0x270] sm:$0xff] %v1901
    %2325 = vst [vmem:[#allocation14 + $0x278] sm:$0xff] %v2012
    %2326 = vst [vmem:[#allocation14 + $0x280] sm:$0xff] %v2014
    %2327 = vst [vmem:[#allocation14 + $0x288] sm:$0xff] %v2125
    %2328 = vst [vmem:[#allocation14 + $0x290] sm:$0xff] %v2127
    %2329 = vst [vmem:[#allocation14 + $0x298] sm:$0xff] %v2227
    %2330 = vst [vmem:[#allocation14 + $0x2a0] sm:$0xff] %v1905
    %2331 = vst [vmem:[#allocation14 + $0x2a8] sm:$0xff] %v1907
    %2332 = vst [vmem:[#allocation14 + $0x2b0] sm:$0xff] %v2018
    %2333 = vst [vmem:[#allocation14 + $0x2b8] sm:$0xff] %v2020
    %2334 = vst [vmem:[#allocation14 + $0x2c0] sm:$0xff] %v2131
    %2335 = vst [vmem:[#allocation14 + $0x2c8] sm:$0xff] %v2133
    %2336 = vst [vmem:[#allocation14 + $0x2d0] sm:$0xff] %v2232
    %2337 = vst [vmem:[#allocation14 + $0x2d8] sm:$0xff] %v1909
    %2338 = vst [vmem:[#allocation14 + $0x2e0] sm:$0xff] %v1911
    %2339 = vst [vmem:[#allocation14 + $0x2e8] sm:$0xff] %v2022
    %2340 = vst [vmem:[#allocation14 + $0x2f0] sm:$0xff] %v2024
    %2341 = vst [vmem:[#allocation14 + $0x2f8] sm:$0xff] %v2135
    %2342 = vst [vmem:[#allocation14 + $0x300] sm:$0xff] %v2137
    %2343 = vst [vmem:[#allocation14 + $0x308] sm:$0xff] %v2235
    %2344 = vst [vmem:[#allocation14 + $0x310] sm:$0xff] %v1915
    %2345 = vst [vmem:[#allocation14 + $0x318] sm:$0xff] %v1917
    %2346 = vst [vmem:[#allocation14 + $0x320] sm:$0xff] %v2028
    %2347 = vst [vmem:[#allocation14 + $0x328] sm:$0xff] %v2030
    %2348 = vst [vmem:[#allocation14 + $0x330] sm:$0xff] %v2141
    %2349 = vst [vmem:[#allocation14 + $0x338] sm:$0xff] %v2143
    %2350 = vst [vmem:[#allocation14 + $0x340] sm:$0xff] %v2240
    %2351 = vst [vmem:[#allocation14 + $0x348] sm:$0xff] %v1919
    %2352 = vst [vmem:[#allocation14 + $0x350] sm:$0xff] %v1921
    %2353 = vst [vmem:[#allocation14 + $0x358] sm:$0xff] %v2032
    %2354 = vst [vmem:[#allocation14 + $0x360] sm:$0xff] %v2034
    %2355 = vst [vmem:[#allocation14 + $0x368] sm:$0xff] %v2145
    %2356 = vst [vmem:[#allocation14 + $0x370] sm:$0xff] %v2147
    %2357 = vst [vmem:[#allocation14 + $0x378] sm:$0xff] %v2243
    // Predicated region
    $region46: #{tpu_custom_call.1} parent=1 // pred_check
      _
    $region47: #{tpu_custom_call.1} parent=1 // pred_check_branch
      %2359 = sbr.rel (0) target = $region49
    $region48: #{tpu_custom_call.1} parent=1 // pred_region
      %s2361 = ssub.s32 2048, 2048
      %2362 = vsyncadd [#allocation4], %s2361
      %s2363 = sshll.u32 [#allocation11], 4
      %s2364 = int_to_ptr.vmem [resolvable:$true] %s2363
      %2369 = dma.vmem_to_hbm [thread:$0]  %s2364, 2048, %s6, [#allocation4], 128, 128, 8
    $region49: #{tpu_custom_call.1} parent=1 // pred_fallthru
      _
    // Predicated region
    $region50: #{tpu_custom_call.1} parent=1 // pred_check
      _
    $region51: #{tpu_custom_call.1} parent=1 // pred_check_branch
      %2371 = sbr.rel (0) target = $region53
    $region52: #{tpu_custom_call.1} parent=1 // pred_region
      %s2373 = ssub.s32 2048, 2048
      %2374 = vsyncadd [#allocation13], %s2373
      %s2375 = sshll.u32 [#allocation12], 4
      %s2376 = int_to_ptr.vmem [resolvable:$true] %s2375
      %2381 = dma.vmem_to_hbm [thread:$0]  %s2376, 2048, %s7, [#allocation13], 128, 128, 8
    $region53: #{tpu_custom_call.1} parent=1 // pred_fallthru
      _
    // Predicated region
    $region54: #{tpu_custom_call.1} parent=1 // pred_check
      _
    $region55: #{tpu_custom_call.1} parent=1 // pred_check_branch
      %2383 = sbr.rel (0) target = $region57
    $region56: #{tpu_custom_call.1} parent=1 // pred_region
      %s2385 = ssub.s32 14336, 14336
      %2386 = vsyncadd [#allocation13], %s2385
      %s2387 = sshll.u32 [#allocation14], 4
      %s2388 = int_to_ptr.vmem [resolvable:$true] %s2387
      %2393 = dma.vmem_to_hbm [thread:$0]  %s2388, 14336, %s8, [#allocation13], 896, 896, 56
    $region57: #{tpu_custom_call.1} parent=1 // pred_fallthru
      _
    // Predicated region
    $region58: #{tpu_custom_call.1} parent=1 // pred_check
      _
    $region59: #{tpu_custom_call.1} parent=1 // pred_check_branch
      %2395 = sbr.rel (0) target = $region61
    $region60: #{tpu_custom_call.1} parent=1 // pred_region
      %2396 = dma.done [#allocation4], 2048
    $region61: #{tpu_custom_call.1} parent=1 // pred_fallthru
      _
    // Predicated region
    $region62: #{tpu_custom_call.1} parent=1 // pred_check
      _
    $region63: #{tpu_custom_call.1} parent=1 // pred_check_branch
      %2398 = sbr.rel (0) target = $region65
    $region64: #{tpu_custom_call.1} parent=1 // pred_region
      %2399 = dma.done [#allocation13], 2048
    $region65: #{tpu_custom_call.1} parent=1 // pred_fallthru
      _
    // Predicated region
    $region66: #{tpu_custom_call.1} parent=1 // pred_check
      _
    $region67: #{tpu_custom_call.1} parent=1 // pred_check_branch
      %2401 = sbr.rel (0) target = $region69
    $region68: #{tpu_custom_call.1} parent=1 // pred_region
      %2402 = dma.done [#allocation13], 14336
    $region69: #{tpu_custom_call.1} parent=1 // pred_fallthru
      _
    %2403 = vsyncpa [#allocation3], 1
    %2404 = vsyncpa [#allocation6], 1
    %2405 = vsyncpa [#allocation9], 1
    %2406 = vsyncpa [#allocation4], 1
    %2407 = vsyncpa [#allocation13], 1

</llo_original>
